<compile_context>
chip_gen: v6e
topology: v6e:2x2x1
jax: 0.10.0
libtpu: 0.0.40
codegen_flags: <defaults>
</compile_context>

<pallas_src>
import math
from functools import partial

import jax
import jax.numpy as jnp
from jax.experimental import pallas as pl
from jax.experimental.pallas import tpu as pltpu

# ---------------- model config (small, synthetic) ----------------
B = 2            # micro batch
S = 8            # sequence length
H = 32           # hidden size
NH = 4           # attention heads
HD = H // NH     # head dim
INNER = 4 * H    # MLP inner dim
N_LAYERS = 2     # layer_idx_start=0, layer_idx_end=2
LN_EPS = 1e-5

# packed per-layer vector rows (all padded to 128 lanes -> one DMA per layer)
VEC_LANES = 128
(R_LN1G, R_LN1B, R_BQ, R_BK, R_BV, R_BO, R_LN2G, R_LN2B, R_BM1, R_BM2) = range(10)
VEC_ROWS = 10
assert H <= VEC_LANES and INNER <= VEC_LANES and H % NH == 0


def _layernorm(x, g, b):
    mu = jnp.mean(x, axis=-1, keepdims=True)
    var = jnp.mean((x - mu) ** 2, axis=-1, keepdims=True)
    return (x - mu) * jax.lax.rsqrt(var + LN_EPS) * g + b


def _new_gelu(x):
    # GPT-2 "gelu_new" (tanh approximation)
    c = math.sqrt(2.0 / math.pi)
    return 0.5 * x * (1.0 + jnp.tanh(c * (x + 0.044715 * x * x * x)))


# ---------------- fused kernel: one grid step == one transformer block ----------------
def gpt_stack_kernel(hs_ref, vec_ref, wqkv_ref, wo_ref, w1_ref, w2_ref, out_ref,
                     *, batch, seq, num_heads):
    layer = pl.program_id(0)

    # Layer 0: pull incoming hidden states into the VMEM-resident output block.
    @pl.when(layer == 0)
    def _():
        out_ref[...] = hs_ref[...]

    M, Hn = out_ref.shape                      # (B*S, H)
    hd = Hn // num_heads
    inner = w1_ref.shape[-1]

    vec = vec_ref[0]                           # (VEC_ROWS, 128) f32 — one DMA per layer
    ln1_g = vec[R_LN1G:R_LN1G + 1, :Hn]
    ln1_b = vec[R_LN1B:R_LN1B + 1, :Hn]
    b_q = vec[R_BQ:R_BQ + 1, :Hn]              # already scaled by 1/sqrt(hd) host-side
    b_k = vec[R_BK:R_BK + 1, :Hn]
    b_v = vec[R_BV:R_BV + 1, :Hn]
    b_o = vec[R_BO:R_BO + 1, :Hn]
    ln2_g = vec[R_LN2G:R_LN2G + 1, :Hn]
    ln2_b = vec[R_LN2B:R_LN2B + 1, :Hn]
    b_m1 = vec[R_BM1:R_BM1 + 1, :inner]
    b_m2 = vec[R_BM2:R_BM2 + 1, :Hn]

    x = out_ref[...]                           # (B*S, H) f32, resident across layers

    # ---- attention sub-block ----
    x_ln = _layernorm(x, ln1_g, ln1_b).astype(jnp.bfloat16)

    # causal additive mask built on the fly (two iotas + a select; no HBM traffic)
    r = jax.lax.broadcasted_iota(jnp.int32, (seq, seq), 0)
    c = jax.lax.broadcasted_iota(jnp.int32, (seq, seq), 1)
    bias = jnp.where(c > r, -1e9, 0.0).astype(jnp.float32)[None]      # (1, S, S)

    attn = jnp.zeros((M, Hn), jnp.float32)
    for h in range(num_heads):                 # static unroll; weights pre-split per head
        qh = (jnp.dot(x_ln, wqkv_ref[0, h],
                      preferred_element_type=jnp.float32)
              + b_q[:, h * hd:(h + 1) * hd])                           # scale folded in
        kh = (jnp.dot(x_ln, wqkv_ref[0, num_heads + h],
                      preferred_element_type=jnp.float32)
              + b_k[:, h * hd:(h + 1) * hd])
        vh = (jnp.dot(x_ln, wqkv_ref[0, 2 * num_heads + h],
                      preferred_element_type=jnp.float32)
              + b_v[:, h * hd:(h + 1) * hd])
        qh = qh.reshape(batch, seq, hd).astype(jnp.bfloat16)
        kh = kh.reshape(batch, seq, hd).astype(jnp.bfloat16)
        vh = vh.reshape(batch, seq, hd).astype(jnp.bfloat16)

        s = jnp.einsum("bqd,bkd->bqk", qh, kh,
                       preferred_element_type=jnp.float32) + bias     # (B, S, S) f32
        m = jnp.max(s, axis=-1, keepdims=True)
        p = jnp.exp(s - m)
        inv = pl.reciprocal(jnp.sum(p, axis=-1, keepdims=True), approx=True)
        p = (p * inv).astype(jnp.bfloat16)
        ctx = jnp.einsum("bqk,bkd->bqd", p, vh,
                         preferred_element_type=jnp.float32)          # (B, S, HD)
        # accumulate through this head's HD rows of w_o -> no concat of head outputs
        attn = attn + jnp.dot(ctx.reshape(M, hd).astype(jnp.bfloat16), wo_ref[0, h],
                              preferred_element_type=jnp.float32)

    x = x + attn + b_o                                                 # residual

    # ---- MLP sub-block (elementwise path stays f32: safe on v5e) ----
    y = _layernorm(x, ln2_g, ln2_b).astype(jnp.bfloat16)
    h1 = jnp.dot(y, w1_ref[0], preferred_element_type=jnp.float32) + b_m1
    h1 = _new_gelu(h1)
    h2 = jnp.dot(h1.astype(jnp.bfloat16), w2_ref[0],
                 preferred_element_type=jnp.float32) + b_m2

    out_ref[...] = x + h2                                              # residual


# ---------------- cost estimate ----------------
def _cost_estimate(hidden2d, packed):
    M, Hn = hidden2d.shape
    per_layer = (2 * M * Hn * Hn * 4                  # q/k/v/o projections
                 + 2 * 2 * B * NH * S * S * HD        # scores + p@v
                 + 2 * 2 * M * Hn * INNER)            # mlp up + down
    transcend = N_LAYERS * (B * NH * S * S + M * INNER + 2 * M + B * NH * S)
    param_bytes = sum(int(a.size) * a.dtype.itemsize for a in packed)
    bytes_accessed = 2 * int(hidden2d.size) * 4 + param_bytes
    return pl.CostEstimate(flops=int(N_LAYERS * per_layer),
                           transcendentals=int(transcend),
                           bytes_accessed=int(bytes_accessed))


# ---------------- wrapper ----------------
def gpt_layers_forward(hidden_states, input_ids, packed):
    """hidden_states: (B, S, H) f32; input_ids: (B, S) i32. Returns (hidden, ids)."""
    Bn, Sn, Hn = hidden_states.shape
    M = Bn * Sn
    vec, wqkv, wo, w1, w2 = packed
    hs2 = hidden_states.reshape(M, Hn)        # lane-friendly 2-D block for the kernel

    kernel = partial(gpt_stack_kernel, batch=Bn, seq=Sn, num_heads=NH)
    out2 = pl.pallas_call(
        kernel,
        out_shape=jax.ShapeDtypeStruct((M, Hn), jnp.float32),
        grid=(vec.shape[0],),                 # one grid step per transformer block
        in_specs=[
            pl.BlockSpec((M, Hn), lambda l: (0, 0)),                      # hidden: resident
            pl.BlockSpec((1,) + vec.shape[1:], lambda l: (l, 0, 0)),      # packed LN/bias vecs
            pl.BlockSpec((1,) + wqkv.shape[1:], lambda l: (l, 0, 0, 0)),  # per-head wq|wk|wv
            pl.BlockSpec((1,) + wo.shape[1:], lambda l: (l, 0, 0, 0)),    # per-head w_o rows
            pl.BlockSpec((1,) + w1.shape[1:], lambda l: (l, 0, 0)),       # mlp up
            pl.BlockSpec((1,) + w2.shape[1:], lambda l: (l, 0, 0)),       # mlp down
        ],
        # Constant index -> hidden states stay VMEM-resident; single HBM writeback.
        out_specs=pl.BlockSpec((M, Hn), lambda l: (0, 0)),
        input_output_aliases={0: 0},          # reuse the hidden-states HBM buffer
        compiler_params=pltpu.CompilerParams(
            dimension_semantics=("arbitrary",)),        # layers are strictly sequential
        cost_estimate=_cost_estimate(hs2, packed),
    )(hs2, vec, wqkv, wo, w1, w2)

    # input_ids.clone(): JAX arrays are immutable -> pass through unchanged.
    return out2.reshape(Bn, Sn, Hn), input_ids


# ---------------- parameter init / host-side packing ----------------
def init_layer_params(key):
    ks = jax.random.split(key, 16)
    w = 0.02
    f32 = jnp.float32

    def nrm(k, shape, s):
        return s * jax.random.normal(k, shape, f32)

    return dict(
        ln1_g=1.0 + nrm(ks[0], (H,), 0.05), ln1_b=nrm(ks[1], (H,), 0.02),
        w_q=nrm(ks[2], (H, H), w), b_q=nrm(ks[3], (H,), w),
        w_k=nrm(ks[4], (H, H), w), b_k=nrm(ks[5], (H,), w),
        w_v=nrm(ks[6], (H, H), w), b_v=nrm(ks[7], (H,), w),
        w_o=nrm(ks[8], (H, H), w), b_o=nrm(ks[9], (H,), w),
        ln2_g=1.0 + nrm(ks[10], (H,), 0.05), ln2_b=nrm(ks[11], (H,), 0.02),
        w_mlp1=nrm(ks[12], (H, INNER), w), b_mlp1=nrm(ks[13], (INNER,), w),
        w_mlp2=nrm(ks[14], (INNER, H), w), b_mlp2=nrm(ks[15], (H,), w),
    )


def pack_params(layer_params):
    """Stack per-layer params into 5 DMA-friendly arrays with a leading layer dim."""
    scale = 1.0 / math.sqrt(HD)
    vecs, wqkvs, wos, w1s, w2s = [], [], [], [], []
    for p in layer_params:
        rows = [p["ln1_g"], p["ln1_b"],
                p["b_q"] * scale, p["b_k"], p["b_v"], p["b_o"],
                p["ln2_g"], p["ln2_b"],
                p["b_mlp1"], p["b_mlp2"]]
        vec = jnp.zeros((VEC_ROWS, VEC_LANES), jnp.float32)
        for i, row in enumerate(rows):
            row = jnp.asarray(row, jnp.float32).reshape(-1)
            vec = vec.at[i, :row.shape[0]].set(row)
        vecs.append(vec)

        def heads_cols(wmat):            # (H, H) -> (NH, H, HD): per-head column blocks
            return jnp.transpose(wmat.reshape(H, NH, HD), (1, 0, 2))

        wqkvs.append(jnp.concatenate(
            [heads_cols(p["w_q"] * scale), heads_cols(p["w_k"]), heads_cols(p["w_v"])],
            axis=0).astype(jnp.bfloat16))                       # (3*NH, H, HD)
        wos.append(p["w_o"].reshape(NH, HD, H).astype(jnp.bfloat16))   # (NH, HD, H)
        w1s.append(p["w_mlp1"].astype(jnp.bfloat16))
        w2s.append(p["w_mlp2"].astype(jnp.bfloat16))
    return (jnp.stack(vecs), jnp.stack(wqkvs), jnp.stack(wos),
            jnp.stack(w1s), jnp.stack(w2s))


# ---------------- pure-JAX reference (correctness guard) ----------------
def _reference_forward(hidden_states, layer_params):
    Bn, Sn, Hn = hidden_states.shape
    r = jax.lax.broadcasted_iota(jnp.int32, (Sn, Sn), 0)
    c = jax.lax.broadcasted_iota(jnp.int32, (Sn, Sn), 1)
    bias = jnp.where(c > r, -1e9, 0.0).astype(jnp.float32)
    x = hidden_states.reshape(Bn * Sn, Hn)
    for p in layer_params:
        x_ln = _layernorm(x, p["ln1_g"], p["ln1_b"])
        q = (x_ln @ p["w_q"] + p["b_q"]).reshape(Bn, Sn, NH, HD)
        k = (x_ln @ p["w_k"] + p["b_k"]).reshape(Bn, Sn, NH, HD)
        v = (x_ln @ p["w_v"] + p["b_v"]).reshape(Bn, Sn, NH, HD)
        s = jnp.einsum("bqhd,bkhd->bhqk", q, k) / math.sqrt(HD) + bias
        a = jax.nn.softmax(s, axis=-1)
        ctx = jnp.einsum("bhqk,bkhd->bqhd", a, v).reshape(Bn * Sn, Hn)
        x = x + ctx @ p["w_o"] + p["b_o"]
        y = _layernorm(x, p["ln2_g"], p["ln2_b"])
        h1 = _new_gelu(y @ p["w_mlp1"] + p["b_mlp1"])
        x = x + h1 @ p["w_mlp2"] + p["b_mlp2"]
    return x.reshape(Bn, Sn, Hn)


if __name__ == "__main__":
    key = jax.random.PRNGKey(0)
    k_hs, k_ids, *k_layers = jax.random.split(key, 2 + N_LAYERS)

    hidden_states = jax.random.normal(k_hs, (B, S, H), jnp.float32)
    input_ids = jax.random.randint(k_ids, (B, S), 0, 50257, jnp.int32)

    layer_params = [init_layer_params(k) for k in k_layers]
    packed = pack_params(layer_params)

    fwd = jax.jit(gpt_layers_forward)
    out_hidden, out_ids = fwd(hidden_states, input_ids, packed)
    jax.block_until_ready(out_hidden)
    jax.block_until_ready(out_ids)

    assert out_hidden.shape == (B, S, H)
    assert out_ids.shape == (B, S)
    assert bool(jnp.all(jnp.isfinite(out_hidden)))
    assert bool(jnp.all(out_ids == input_ids))

    # sanity vs pure-JAX f32 reference (loose tol: kernel uses bf16 matmul operands)
    ref = _reference_forward(hidden_states, layer_params)
    max_err = float(jnp.max(jnp.abs(out_hidden - ref)))
    assert max_err < 5e-2, f"max abs err {max_err}"

    print("KERNEL_OK")
</pallas_src>

<mosaic_0001>
module attributes {stable_mosaic.version = 11 : i64} {
  func.func @gpt_stack_kernel(%arg0: i32, %arg1: memref<16x32xf32, #tpu.memory_space<vmem>>, %arg2: memref<1x10x128xf32, #tpu.memory_space<vmem>>, %arg3: memref<1x12x32x8xbf16, #tpu.memory_space<vmem>>, %arg4: memref<1x4x8x32xbf16, #tpu.memory_space<vmem>>, %arg5: memref<1x32x128xbf16, #tpu.memory_space<vmem>>, %arg6: memref<1x128x32xbf16, #tpu.memory_space<vmem>>, %arg7: memref<16x32xf32, #tpu.memory_space<vmem>>) attributes {dimension_semantics = [#tpu.dimension_semantics<arbitrary>], iteration_bounds = array<i64: 2>, scalar_prefetch = 0 : i64, scratch_operands = 0 : i64, tpu.core_type = #tpu.core_type<tc>, window_params = [{pipeline_mode = #tpu.pipeline_mode<synchronous>, transform_indices = @transform_0, window_bounds = array<i64: 16, 32>}, {transform_indices = @transform_1, window_bounds = array<i64: 1, 10, 128>}, {transform_indices = @transform_2, window_bounds = array<i64: 1, 12, 32, 8>}, {transform_indices = @transform_3, window_bounds = array<i64: 1, 4, 8, 32>}, {transform_indices = @transform_4, window_bounds = array<i64: 1, 32, 128>}, {transform_indices = @transform_5, window_bounds = array<i64: 1, 128, 32>}, {pipeline_mode = #tpu.pipeline_mode<synchronous>, transform_indices = @transform_6, window_bounds = array<i64: 16, 32>}]} {
    %c0_i32 = arith.constant 0 : i32
    %0 = arith.cmpi eq, %arg0, %c0_i32 : i32
    %1 = arith.extui %0 : i1 to i32
    %c0_i32_0 = arith.constant 0 : i32
    %2 = arith.cmpi ne, %1, %c0_i32_0 : i32
    scf.if %2 {
      %c0_116 = arith.constant 0 : index
      %c0_117 = arith.constant 0 : index
      %279 = vector.load %arg1[%c0_116, %c0_117] : memref<16x32xf32, #tpu.memory_space<vmem>>, vector<16x32xf32>
      %c0_118 = arith.constant 0 : index
      %c0_119 = arith.constant 0 : index
      %280 = vector.load %arg7[%c0_118, %c0_119] : memref<16x32xf32, #tpu.memory_space<vmem>>, vector<16x32xf32>
      tpu.vector_store %arg7[%c0_118, %c0_119], %279 {strides = array<i32>} : memref<16x32xf32, #tpu.memory_space<vmem>>, vector<16x32xf32>,
    } else {
    }
    %c0 = arith.constant 0 : index
    %c0_1 = arith.constant 0 : index
    %c0_2 = arith.constant 0 : index
    %3 = vector.load %arg2[%c0, %c0_1, %c0_2] : memref<1x10x128xf32, #tpu.memory_space<vmem>>, vector<1x10x128xf32>
    %4 = vector.shape_cast %3 : vector<1x10x128xf32> to vector<10x128xf32>
    %5 = vector.extract_strided_slice %4 {offsets = [0, 0], sizes = [1, 32], strides = [1, 1]} : vector<10x128xf32> to vector<1x32xf32>
    %6 = vector.extract_strided_slice %4 {offsets = [1, 0], sizes = [1, 32], strides = [1, 1]} : vector<10x128xf32> to vector<1x32xf32>
    %7 = vector.extract_strided_slice %4 {offsets = [2, 0], sizes = [1, 32], strides = [1, 1]} : vector<10x128xf32> to vector<1x32xf32>
    %8 = vector.extract_strided_slice %4 {offsets = [3, 0], sizes = [1, 32], strides = [1, 1]} : vector<10x128xf32> to vector<1x32xf32>
    %9 = vector.extract_strided_slice %4 {offsets = [4, 0], sizes = [1, 32], strides = [1, 1]} : vector<10x128xf32> to vector<1x32xf32>
    %10 = vector.extract_strided_slice %4 {offsets = [5, 0], sizes = [1, 32], strides = [1, 1]} : vector<10x128xf32> to vector<1x32xf32>
    %11 = vector.extract_strided_slice %4 {offsets = [6, 0], sizes = [1, 32], strides = [1, 1]} : vector<10x128xf32> to vector<1x32xf32>
    %12 = vector.extract_strided_slice %4 {offsets = [7, 0], sizes = [1, 32], strides = [1, 1]} : vector<10x128xf32> to vector<1x32xf32>
    %13 = vector.extract_strided_slice %4 {offsets = [8, 0], sizes = [1, 128], strides = [1, 1]} : vector<10x128xf32> to vector<1x128xf32>
    %14 = vector.extract_strided_slice %4 {offsets = [9, 0], sizes = [1, 32], strides = [1, 1]} : vector<10x128xf32> to vector<1x32xf32>
    %c0_3 = arith.constant 0 : index
    %c0_4 = arith.constant 0 : index
    %15 = vector.load %arg7[%c0_3, %c0_4] : memref<16x32xf32, #tpu.memory_space<vmem>>, vector<16x32xf32>
    %cst = arith.constant dense<0.000000e+00> : vector<16xf32>
    %16 = vector.multi_reduction <add>, %15, %cst [1] : vector<16x32xf32> to vector<16xf32>
    %17 = vector.shape_cast %16 : vector<16xf32> to vector<16x1xf32>
    %cst_5 = arith.constant 3.200000e+01 : f32
    %18 = vector.broadcast %cst_5 : f32 to vector<16x1xf32>
    %19 = arith.divf %17, %18 : vector<16x1xf32>
    %20 = vector.broadcast %19 : vector<16x1xf32> to vector<16x32xf32>
    %21 = arith.subf %15, %20 : vector<16x32xf32>
    %22 = arith.mulf %21, %21 : vector<16x32xf32>
    %cst_6 = arith.constant dense<0.000000e+00> : vector<16xf32>
    %23 = vector.multi_reduction <add>, %22, %cst_6 [1] : vector<16x32xf32> to vector<16xf32>
    %24 = vector.shape_cast %23 : vector<16xf32> to vector<16x1xf32>
    %cst_7 = arith.constant 3.200000e+01 : f32
    %25 = vector.broadcast %cst_7 : f32 to vector<16x1xf32>
    %26 = arith.divf %24, %25 : vector<16x1xf32>
    %27 = vector.broadcast %19 : vector<16x1xf32> to vector<16x32xf32>
    %28 = arith.subf %15, %27 : vector<16x32xf32>
    %cst_8 = arith.constant 9.99999974E-6 : f32
    %29 = vector.broadcast %cst_8 : f32 to vector<16x1xf32>
    %30 = arith.addf %26, %29 : vector<16x1xf32>
    %31 = math.rsqrt %30 : vector<16x1xf32>
    %32 = vector.broadcast %31 : vector<16x1xf32> to vector<16x32xf32>
    %33 = arith.mulf %28, %32 : vector<16x32xf32>
    %34 = vector.broadcast %5 : vector<1x32xf32> to vector<16x32xf32>
    %35 = arith.mulf %33, %34 : vector<16x32xf32>
    %36 = vector.broadcast %6 : vector<1x32xf32> to vector<16x32xf32>
    %37 = arith.addf %35, %36 : vector<16x32xf32>
    %38 = arith.truncf %37 : vector<16x32xf32> to vector<16x32xbf16>
    %39 = tpu.iota {dimensions = array<i32: 0>} : vector<8x8xi32>
    %40 = tpu.iota {dimensions = array<i32: 1>} : vector<8x8xi32>
    %41 = arith.cmpi sgt, %40, %39 : vector<8x8xi32>
    %cst_9 = arith.constant -1.000000e+09 : f32
    %cst_10 = arith.constant 0.000000e+00 : f32
    %42 = vector.broadcast %cst_9 : f32 to vector<8x8xf32>
    %43 = vector.broadcast %cst_10 : f32 to vector<8x8xf32>
    %44 = arith.select %41, %42, %43 : vector<8x8xi1>, vector<8x8xf32>
    %45 = vector.shape_cast %44 : vector<8x8xf32> to vector<1x8x8xf32>
    %cst_11 = arith.constant 0.000000e+00 : f32
    %46 = vector.broadcast %cst_11 : f32 to vector<16x32xf32>
    %c0_12 = arith.constant 0 : index
    %c0_13 = arith.constant 0 : index
    %c0_14 = arith.constant 0 : index
    %c0_15 = arith.constant 0 : index
    %47 = vector.load %arg3[%c0_12, %c0_13, %c0_14, %c0_15] : memref<1x12x32x8xbf16, #tpu.memory_space<vmem>>, vector<1x1x32x8xbf16>
    %48 = vector.shape_cast %47 : vector<1x1x32x8xbf16> to vector<32x8xbf16>
    %cst_16 = arith.constant dense<0.000000e+00> : vector<16x8xf32>
    %49 = tpu.matmul %38, %48, %cst_16 {dimension_numbers = #tpu.dot_dimension_numbers<[1], [0], [0], [1], [0, 0, 1, 1], [], []>} : vector<16x32xbf16>, vector<32x8xbf16>, vector<16x8xf32> -> vector<16x8xf32>
    %50 = vector.extract_strided_slice %7 {offsets = [0, 0], sizes = [1, 8], strides = [1, 1]} : vector<1x32xf32> to vector<1x8xf32>
    %51 = vector.broadcast %50 : vector<1x8xf32> to vector<16x8xf32>
    %52 = arith.addf %49, %51 : vector<16x8xf32>
    %c0_17 = arith.constant 0 : index
    %c4 = arith.constant 4 : index
    %c0_18 = arith.constant 0 : index
    %c0_19 = arith.constant 0 : index
    %53 = vector.load %arg3[%c0_17, %c4, %c0_18, %c0_19] : memref<1x12x32x8xbf16, #tpu.memory_space<vmem>>, vector<1x1x32x8xbf16>
    %54 = vector.shape_cast %53 : vector<1x1x32x8xbf16> to vector<32x8xbf16>
    %cst_20 = arith.constant dense<0.000000e+00> : vector<16x8xf32>
    %55 = tpu.matmul %38, %54, %cst_20 {dimension_numbers = #tpu.dot_dimension_numbers<[1], [0], [0], [1], [0, 0, 1, 1], [], []>} : vector<16x32xbf16>, vector<32x8xbf16>, vector<16x8xf32> -> vector<16x8xf32>
    %56 = vector.extract_strided_slice %8 {offsets = [0, 0], sizes = [1, 8], strides = [1, 1]} : vector<1x32xf32> to vector<1x8xf32>
    %57 = vector.broadcast %56 : vector<1x8xf32> to vector<16x8xf32>
    %58 = arith.addf %55, %57 : vector<16x8xf32>
    %c0_21 = arith.constant 0 : index
    %c8 = arith.constant 8 : index
    %c0_22 = arith.constant 0 : index
    %c0_23 = arith.constant 0 : index
    %59 = vector.load %arg3[%c0_21, %c8, %c0_22, %c0_23] : memref<1x12x32x8xbf16, #tpu.memory_space<vmem>>, vector<1x1x32x8xbf16>
    %60 = vector.shape_cast %59 : vector<1x1x32x8xbf16> to vector<32x8xbf16>
    %cst_24 = arith.constant dense<0.000000e+00> : vector<16x8xf32>
    %61 = tpu.matmul %38, %60, %cst_24 {dimension_numbers = #tpu.dot_dimension_numbers<[1], [0], [0], [1], [0, 0, 1, 1], [], []>} : vector<16x32xbf16>, vector<32x8xbf16>, vector<16x8xf32> -> vector<16x8xf32>
    %62 = vector.extract_strided_slice %9 {offsets = [0, 0], sizes = [1, 8], strides = [1, 1]} : vector<1x32xf32> to vector<1x8xf32>
    %63 = vector.broadcast %62 : vector<1x8xf32> to vector<16x8xf32>
    %64 = arith.addf %61, %63 : vector<16x8xf32>
    %65 = vector.shape_cast %52 : vector<16x8xf32> to vector<2x8x8xf32>
    %66 = arith.truncf %65 : vector<2x8x8xf32> to vector<2x8x8xbf16>
    %67 = vector.shape_cast %58 : vector<16x8xf32> to vector<2x8x8xf32>
    %68 = arith.truncf %67 : vector<2x8x8xf32> to vector<2x8x8xbf16>
    %69 = vector.shape_cast %64 : vector<16x8xf32> to vector<2x8x8xf32>
    %70 = arith.truncf %69 : vector<2x8x8xf32> to vector<2x8x8xbf16>
    "tpu.trace_start"() <{level = 10 : i32, message = "bqd,bkd->bqk"}> : () -> ()
    %cst_25 = arith.constant dense<0.000000e+00> : vector<2x8x8xf32>
    %71 = tpu.matmul %66, %68, %cst_25 {dimension_numbers = #tpu.dot_dimension_numbers<[2], [2], [1], [1], [0, 0, 0, 1, 1, 1], [0], [0]>} : vector<2x8x8xbf16>, vector<2x8x8xbf16>, vector<2x8x8xf32> -> vector<2x8x8xf32>
    "tpu.trace_stop"() : () -> ()
    %72 = vector.broadcast %45 : vector<1x8x8xf32> to vector<2x8x8xf32>
    %73 = arith.addf %71, %72 : vector<2x8x8xf32>
    %cst_26 = arith.constant dense<0xFF800000> : vector<2x8xf32>
    %74 = vector.multi_reduction <maximumf>, %73, %cst_26 [2] : vector<2x8x8xf32> to vector<2x8xf32>
    %75 = vector.shape_cast %74 : vector<2x8xf32> to vector<2x8x1xf32>
    %76 = vector.broadcast %75 : vector<2x8x1xf32> to vector<2x8x8xf32>
    %77 = arith.subf %73, %76 : vector<2x8x8xf32>
    %78 = math.exp %77 : vector<2x8x8xf32>
    %cst_27 = arith.constant dense<0.000000e+00> : vector<2x8xf32>
    %79 = vector.multi_reduction <add>, %78, %cst_27 [2] : vector<2x8x8xf32> to vector<2x8xf32>
    %80 = vector.shape_cast %79 : vector<2x8xf32> to vector<2x8x1xf32>
    %81 = tpu.reciprocal %80 {approx = true} : vector<2x8x1xf32> -> vector<2x8x1xf32>
    %82 = vector.broadcast %81 : vector<2x8x1xf32> to vector<2x8x8xf32>
    %83 = arith.mulf %78, %82 : vector<2x8x8xf32>
    %84 = arith.truncf %83 : vector<2x8x8xf32> to vector<2x8x8xbf16>
    "tpu.trace_start"() <{level = 10 : i32, message = "bqk,bkd->bqd"}> : () -> ()
    %cst_28 = arith.constant dense<0.000000e+00> : vector<2x8x8xf32>
    %85 = tpu.matmul %84, %70, %cst_28 {dimension_numbers = #tpu.dot_dimension_numbers<[2], [1], [1], [2], [0, 0, 0, 1, 1, 2], [0], [0]>} : vector<2x8x8xbf16>, vector<2x8x8xbf16>, vector<2x8x8xf32> -> vector<2x8x8xf32>
    "tpu.trace_stop"() : () -> ()
    %86 = vector.shape_cast %85 : vector<2x8x8xf32> to vector<16x8xf32>
    %87 = arith.truncf %86 : vector<16x8xf32> to vector<16x8xbf16>
    %c0_29 = arith.constant 0 : index
    %c0_30 = arith.constant 0 : index
    %c0_31 = arith.constant 0 : index
    %c0_32 = arith.constant 0 : index
    %88 = vector.load %arg4[%c0_29, %c0_30, %c0_31, %c0_32] : memref<1x4x8x32xbf16, #tpu.memory_space<vmem>>, vector<1x1x8x32xbf16>
    %89 = vector.shape_cast %88 : vector<1x1x8x32xbf16> to vector<8x32xbf16>
    %cst_33 = arith.constant dense<0.000000e+00> : vector<16x32xf32>
    %90 = tpu.matmul %87, %89, %cst_33 {dimension_numbers = #tpu.dot_dimension_numbers<[1], [0], [0], [1], [0, 0, 1, 1], [], []>} : vector<16x8xbf16>, vector<8x32xbf16>, vector<16x32xf32> -> vector<16x32xf32>
    %91 = arith.addf %46, %90 : vector<16x32xf32>
    %c0_34 = arith.constant 0 : index
    %c1 = arith.constant 1 : index
    %c0_35 = arith.constant 0 : index
    %c0_36 = arith.constant 0 : index
    %92 = vector.load %arg3[%c0_34, %c1, %c0_35, %c0_36] : memref<1x12x32x8xbf16, #tpu.memory_space<vmem>>, vector<1x1x32x8xbf16>
    %93 = vector.shape_cast %92 : vector<1x1x32x8xbf16> to vector<32x8xbf16>
    %cst_37 = arith.constant dense<0.000000e+00> : vector<16x8xf32>
    %94 = tpu.matmul %38, %93, %cst_37 {dimension_numbers = #tpu.dot_dimension_numbers<[1], [0], [0], [1], [0, 0, 1, 1], [], []>} : vector<16x32xbf16>, vector<32x8xbf16>, vector<16x8xf32> -> vector<16x8xf32>
    %95 = vector.extract_strided_slice %7 {offsets = [0, 8], sizes = [1, 8], strides = [1, 1]} : vector<1x32xf32> to vector<1x8xf32>
    %96 = vector.broadcast %95 : vector<1x8xf32> to vector<16x8xf32>
    %97 = arith.addf %94, %96 : vector<16x8xf32>
    %c0_38 = arith.constant 0 : index
    %c5 = arith.constant 5 : index
    %c0_39 = arith.constant 0 : index
    %c0_40 = arith.constant 0 : index
    %98 = vector.load %arg3[%c0_38, %c5, %c0_39, %c0_40] : memref<1x12x32x8xbf16, #tpu.memory_space<vmem>>, vector<1x1x32x8xbf16>
    %99 = vector.shape_cast %98 : vector<1x1x32x8xbf16> to vector<32x8xbf16>
    %cst_41 = arith.constant dense<0.000000e+00> : vector<16x8xf32>
    %100 = tpu.matmul %38, %99, %cst_41 {dimension_numbers = #tpu.dot_dimension_numbers<[1], [0], [0], [1], [0, 0, 1, 1], [], []>} : vector<16x32xbf16>, vector<32x8xbf16>, vector<16x8xf32> -> vector<16x8xf32>
    %101 = vector.extract_strided_slice %8 {offsets = [0, 8], sizes = [1, 8], strides = [1, 1]} : vector<1x32xf32> to vector<1x8xf32>
    %102 = vector.broadcast %101 : vector<1x8xf32> to vector<16x8xf32>
    %103 = arith.addf %100, %102 : vector<16x8xf32>
    %c0_42 = arith.constant 0 : index
    %c9 = arith.constant 9 : index
    %c0_43 = arith.constant 0 : index
    %c0_44 = arith.constant 0 : index
    %104 = vector.load %arg3[%c0_42, %c9, %c0_43, %c0_44] : memref<1x12x32x8xbf16, #tpu.memory_space<vmem>>, vector<1x1x32x8xbf16>
    %105 = vector.shape_cast %104 : vector<1x1x32x8xbf16> to vector<32x8xbf16>
    %cst_45 = arith.constant dense<0.000000e+00> : vector<16x8xf32>
    %106 = tpu.matmul %38, %105, %cst_45 {dimension_numbers = #tpu.dot_dimension_numbers<[1], [0], [0], [1], [0, 0, 1, 1], [], []>} : vector<16x32xbf16>, vector<32x8xbf16>, vector<16x8xf32> -> vector<16x8xf32>
    %107 = vector.extract_strided_slice %9 {offsets = [0, 8], sizes = [1, 8], strides = [1, 1]} : vector<1x32xf32> to vector<1x8xf32>
    %108 = vector.broadcast %107 : vector<1x8xf32> to vector<16x8xf32>
    %109 = arith.addf %106, %108 : vector<16x8xf32>
    %110 = vector.shape_cast %97 : vector<16x8xf32> to vector<2x8x8xf32>
    %111 = arith.truncf %110 : vector<2x8x8xf32> to vector<2x8x8xbf16>
    %112 = vector.shape_cast %103 : vector<16x8xf32> to vector<2x8x8xf32>
    %113 = arith.truncf %112 : vector<2x8x8xf32> to vector<2x8x8xbf16>
    %114 = vector.shape_cast %109 : vector<16x8xf32> to vector<2x8x8xf32>
    %115 = arith.truncf %114 : vector<2x8x8xf32> to vector<2x8x8xbf16>
    "tpu.trace_start"() <{level = 10 : i32, message = "bqd,bkd->bqk"}> : () -> ()
    %cst_46 = arith.constant dense<0.000000e+00> : vector<2x8x8xf32>
    %116 = tpu.matmul %111, %113, %cst_46 {dimension_numbers = #tpu.dot_dimension_numbers<[2], [2], [1], [1], [0, 0, 0, 1, 1, 1], [0], [0]>} : vector<2x8x8xbf16>, vector<2x8x8xbf16>, vector<2x8x8xf32> -> vector<2x8x8xf32>
    "tpu.trace_stop"() : () -> ()
    %117 = vector.broadcast %45 : vector<1x8x8xf32> to vector<2x8x8xf32>
    %118 = arith.addf %116, %117 : vector<2x8x8xf32>
    %cst_47 = arith.constant dense<0xFF800000> : vector<2x8xf32>
    %119 = vector.multi_reduction <maximumf>, %118, %cst_47 [2] : vector<2x8x8xf32> to vector<2x8xf32>
    %120 = vector.shape_cast %119 : vector<2x8xf32> to vector<2x8x1xf32>
    %121 = vector.broadcast %120 : vector<2x8x1xf32> to vector<2x8x8xf32>
    %122 = arith.subf %118, %121 : vector<2x8x8xf32>
    %123 = math.exp %122 : vector<2x8x8xf32>
    %cst_48 = arith.constant dense<0.000000e+00> : vector<2x8xf32>
    %124 = vector.multi_reduction <add>, %123, %cst_48 [2] : vector<2x8x8xf32> to vector<2x8xf32>
    %125 = vector.shape_cast %124 : vector<2x8xf32> to vector<2x8x1xf32>
    %126 = tpu.reciprocal %125 {approx = true} : vector<2x8x1xf32> -> vector<2x8x1xf32>
    %127 = vector.broadcast %126 : vector<2x8x1xf32> to vector<2x8x8xf32>
    %128 = arith.mulf %123, %127 : vector<2x8x8xf32>
    %129 = arith.truncf %128 : vector<2x8x8xf32> to vector<2x8x8xbf16>
    "tpu.trace_start"() <{level = 10 : i32, message = "bqk,bkd->bqd"}> : () -> ()
    %cst_49 = arith.constant dense<0.000000e+00> : vector<2x8x8xf32>
    %130 = tpu.matmul %129, %115, %cst_49 {dimension_numbers = #tpu.dot_dimension_numbers<[2], [1], [1], [2], [0, 0, 0, 1, 1, 2], [0], [0]>} : vector<2x8x8xbf16>, vector<2x8x8xbf16>, vector<2x8x8xf32> -> vector<2x8x8xf32>
    "tpu.trace_stop"() : () -> ()
    %131 = vector.shape_cast %130 : vector<2x8x8xf32> to vector<16x8xf32>
    %132 = arith.truncf %131 : vector<16x8xf32> to vector<16x8xbf16>
    %c0_50 = arith.constant 0 : index
    %c1_51 = arith.constant 1 : index
    %c0_52 = arith.constant 0 : index
    %c0_53 = arith.constant 0 : index
    %133 = vector.load %arg4[%c0_50, %c1_51, %c0_52, %c0_53] : memref<1x4x8x32xbf16, #tpu.memory_space<vmem>>, vector<1x1x8x32xbf16>
    %134 = vector.shape_cast %133 : vector<1x1x8x32xbf16> to vector<8x32xbf16>
    %cst_54 = arith.constant dense<0.000000e+00> : vector<16x32xf32>
    %135 = tpu.matmul %132, %134, %cst_54 {dimension_numbers = #tpu.dot_dimension_numbers<[1], [0], [0], [1], [0, 0, 1, 1], [], []>} : vector<16x8xbf16>, vector<8x32xbf16>, vector<16x32xf32> -> vector<16x32xf32>
    %136 = arith.addf %91, %135 : vector<16x32xf32>
    %c0_55 = arith.constant 0 : index
    %c2 = arith.constant 2 : index
    %c0_56 = arith.constant 0 : index
    %c0_57 = arith.constant 0 : index
    %137 = vector.load %arg3[%c0_55, %c2, %c0_56, %c0_57] : memref<1x12x32x8xbf16, #tpu.memory_space<vmem>>, vector<1x1x32x8xbf16>
    %138 = vector.shape_cast %137 : vector<1x1x32x8xbf16> to vector<32x8xbf16>
    %cst_58 = arith.constant dense<0.000000e+00> : vector<16x8xf32>
    %139 = tpu.matmul %38, %138, %cst_58 {dimension_numbers = #tpu.dot_dimension_numbers<[1], [0], [0], [1], [0, 0, 1, 1], [], []>} : vector<16x32xbf16>, vector<32x8xbf16>, vector<16x8xf32> -> vector<16x8xf32>
    %140 = vector.extract_strided_slice %7 {offsets = [0, 16], sizes = [1, 8], strides = [1, 1]} : vector<1x32xf32> to vector<1x8xf32>
    %141 = vector.broadcast %140 : vector<1x8xf32> to vector<16x8xf32>
    %142 = arith.addf %139, %141 : vector<16x8xf32>
    %c0_59 = arith.constant 0 : index
    %c6 = arith.constant 6 : index
    %c0_60 = arith.constant 0 : index
    %c0_61 = arith.constant 0 : index
    %143 = vector.load %arg3[%c0_59, %c6, %c0_60, %c0_61] : memref<1x12x32x8xbf16, #tpu.memory_space<vmem>>, vector<1x1x32x8xbf16>
    %144 = vector.shape_cast %143 : vector<1x1x32x8xbf16> to vector<32x8xbf16>
    %cst_62 = arith.constant dense<0.000000e+00> : vector<16x8xf32>
    %145 = tpu.matmul %38, %144, %cst_62 {dimension_numbers = #tpu.dot_dimension_numbers<[1], [0], [0], [1], [0, 0, 1, 1], [], []>} : vector<16x32xbf16>, vector<32x8xbf16>, vector<16x8xf32> -> vector<16x8xf32>
    %146 = vector.extract_strided_slice %8 {offsets = [0, 16], sizes = [1, 8], strides = [1, 1]} : vector<1x32xf32> to vector<1x8xf32>
    %147 = vector.broadcast %146 : vector<1x8xf32> to vector<16x8xf32>
    %148 = arith.addf %145, %147 : vector<16x8xf32>
    %c0_63 = arith.constant 0 : index
    %c10 = arith.constant 10 : index
    %c0_64 = arith.constant 0 : index
    %c0_65 = arith.constant 0 : index
    %149 = vector.load %arg3[%c0_63, %c10, %c0_64, %c0_65] : memref<1x12x32x8xbf16, #tpu.memory_space<vmem>>, vector<1x1x32x8xbf16>
    %150 = vector.shape_cast %149 : vector<1x1x32x8xbf16> to vector<32x8xbf16>
    %cst_66 = arith.constant dense<0.000000e+00> : vector<16x8xf32>
    %151 = tpu.matmul %38, %150, %cst_66 {dimension_numbers = #tpu.dot_dimension_numbers<[1], [0], [0], [1], [0, 0, 1, 1], [], []>} : vector<16x32xbf16>, vector<32x8xbf16>, vector<16x8xf32> -> vector<16x8xf32>
    %152 = vector.extract_strided_slice %9 {offsets = [0, 16], sizes = [1, 8], strides = [1, 1]} : vector<1x32xf32> to vector<1x8xf32>
    %153 = vector.broadcast %152 : vector<1x8xf32> to vector<16x8xf32>
    %154 = arith.addf %151, %153 : vector<16x8xf32>
    %155 = vector.shape_cast %142 : vector<16x8xf32> to vector<2x8x8xf32>
    %156 = arith.truncf %155 : vector<2x8x8xf32> to vector<2x8x8xbf16>
    %157 = vector.shape_cast %148 : vector<16x8xf32> to vector<2x8x8xf32>
    %158 = arith.truncf %157 : vector<2x8x8xf32> to vector<2x8x8xbf16>
    %159 = vector.shape_cast %154 : vector<16x8xf32> to vector<2x8x8xf32>
    %160 = arith.truncf %159 : vector<2x8x8xf32> to vector<2x8x8xbf16>
    "tpu.trace_start"() <{level = 10 : i32, message = "bqd,bkd->bqk"}> : () -> ()
    %cst_67 = arith.constant dense<0.000000e+00> : vector<2x8x8xf32>
    %161 = tpu.matmul %156, %158, %cst_67 {dimension_numbers = #tpu.dot_dimension_numbers<[2], [2], [1], [1], [0, 0, 0, 1, 1, 1], [0], [0]>} : vector<2x8x8xbf16>, vector<2x8x8xbf16>, vector<2x8x8xf32> -> vector<2x8x8xf32>
    "tpu.trace_stop"() : () -> ()
    %162 = vector.broadcast %45 : vector<1x8x8xf32> to vector<2x8x8xf32>
    %163 = arith.addf %161, %162 : vector<2x8x8xf32>
    %cst_68 = arith.constant dense<0xFF800000> : vector<2x8xf32>
    %164 = vector.multi_reduction <maximumf>, %163, %cst_68 [2] : vector<2x8x8xf32> to vector<2x8xf32>
    %165 = vector.shape_cast %164 : vector<2x8xf32> to vector<2x8x1xf32>
    %166 = vector.broadcast %165 : vector<2x8x1xf32> to vector<2x8x8xf32>
    %167 = arith.subf %163, %166 : vector<2x8x8xf32>
    %168 = math.exp %167 : vector<2x8x8xf32>
    %cst_69 = arith.constant dense<0.000000e+00> : vector<2x8xf32>
    %169 = vector.multi_reduction <add>, %168, %cst_69 [2] : vector<2x8x8xf32> to vector<2x8xf32>
    %170 = vector.shape_cast %169 : vector<2x8xf32> to vector<2x8x1xf32>
    %171 = tpu.reciprocal %170 {approx = true} : vector<2x8x1xf32> -> vector<2x8x1xf32>
    %172 = vector.broadcast %171 : vector<2x8x1xf32> to vector<2x8x8xf32>
    %173 = arith.mulf %168, %172 : vector<2x8x8xf32>
    %174 = arith.truncf %173 : vector<2x8x8xf32> to vector<2x8x8xbf16>
    "tpu.trace_start"() <{level = 10 : i32, message = "bqk,bkd->bqd"}> : () -> ()
    %cst_70 = arith.constant dense<0.000000e+00> : vector<2x8x8xf32>
    %175 = tpu.matmul %174, %160, %cst_70 {dimension_numbers = #tpu.dot_dimension_numbers<[2], [1], [1], [2], [0, 0, 0, 1, 1, 2], [0], [0]>} : vector<2x8x8xbf16>, vector<2x8x8xbf16>, vector<2x8x8xf32> -> vector<2x8x8xf32>
    "tpu.trace_stop"() : () -> ()
    %176 = vector.shape_cast %175 : vector<2x8x8xf32> to vector<16x8xf32>
    %177 = arith.truncf %176 : vector<16x8xf32> to vector<16x8xbf16>
    %c0_71 = arith.constant 0 : index
    %c2_72 = arith.constant 2 : index
    %c0_73 = arith.constant 0 : index
    %c0_74 = arith.constant 0 : index
    %178 = vector.load %arg4[%c0_71, %c2_72, %c0_73, %c0_74] : memref<1x4x8x32xbf16, #tpu.memory_space<vmem>>, vector<1x1x8x32xbf16>
    %179 = vector.shape_cast %178 : vector<1x1x8x32xbf16> to vector<8x32xbf16>
    %cst_75 = arith.constant dense<0.000000e+00> : vector<16x32xf32>
    %180 = tpu.matmul %177, %179, %cst_75 {dimension_numbers = #tpu.dot_dimension_numbers<[1], [0], [0], [1], [0, 0, 1, 1], [], []>} : vector<16x8xbf16>, vector<8x32xbf16>, vector<16x32xf32> -> vector<16x32xf32>
    %181 = arith.addf %136, %180 : vector<16x32xf32>
    %c0_76 = arith.constant 0 : index
    %c3 = arith.constant 3 : index
    %c0_77 = arith.constant 0 : index
    %c0_78 = arith.constant 0 : index
    %182 = vector.load %arg3[%c0_76, %c3, %c0_77, %c0_78] : memref<1x12x32x8xbf16, #tpu.memory_space<vmem>>, vector<1x1x32x8xbf16>
    %183 = vector.shape_cast %182 : vector<1x1x32x8xbf16> to vector<32x8xbf16>
    %cst_79 = arith.constant dense<0.000000e+00> : vector<16x8xf32>
    %184 = tpu.matmul %38, %183, %cst_79 {dimension_numbers = #tpu.dot_dimension_numbers<[1], [0], [0], [1], [0, 0, 1, 1], [], []>} : vector<16x32xbf16>, vector<32x8xbf16>, vector<16x8xf32> -> vector<16x8xf32>
    %185 = vector.extract_strided_slice %7 {offsets = [0, 24], sizes = [1, 8], strides = [1, 1]} : vector<1x32xf32> to vector<1x8xf32>
    %186 = vector.broadcast %185 : vector<1x8xf32> to vector<16x8xf32>
    %187 = arith.addf %184, %186 : vector<16x8xf32>
    %c0_80 = arith.constant 0 : index
    %c7 = arith.constant 7 : index
    %c0_81 = arith.constant 0 : index
    %c0_82 = arith.constant 0 : index
    %188 = vector.load %arg3[%c0_80, %c7, %c0_81, %c0_82] : memref<1x12x32x8xbf16, #tpu.memory_space<vmem>>, vector<1x1x32x8xbf16>
    %189 = vector.shape_cast %188 : vector<1x1x32x8xbf16> to vector<32x8xbf16>
    %cst_83 = arith.constant dense<0.000000e+00> : vector<16x8xf32>
    %190 = tpu.matmul %38, %189, %cst_83 {dimension_numbers = #tpu.dot_dimension_numbers<[1], [0], [0], [1], [0, 0, 1, 1], [], []>} : vector<16x32xbf16>, vector<32x8xbf16>, vector<16x8xf32> -> vector<16x8xf32>
    %191 = vector.extract_strided_slice %8 {offsets = [0, 24], sizes = [1, 8], strides = [1, 1]} : vector<1x32xf32> to vector<1x8xf32>
    %192 = vector.broadcast %191 : vector<1x8xf32> to vector<16x8xf32>
    %193 = arith.addf %190, %192 : vector<16x8xf32>
    %c0_84 = arith.constant 0 : index
    %c11 = arith.constant 11 : index
    %c0_85 = arith.constant 0 : index
    %c0_86 = arith.constant 0 : index
    %194 = vector.load %arg3[%c0_84, %c11, %c0_85, %c0_86] : memref<1x12x32x8xbf16, #tpu.memory_space<vmem>>, vector<1x1x32x8xbf16>
    %195 = vector.shape_cast %194 : vector<1x1x32x8xbf16> to vector<32x8xbf16>
    %cst_87 = arith.constant dense<0.000000e+00> : vector<16x8xf32>
    %196 = tpu.matmul %38, %195, %cst_87 {dimension_numbers = #tpu.dot_dimension_numbers<[1], [0], [0], [1], [0, 0, 1, 1], [], []>} : vector<16x32xbf16>, vector<32x8xbf16>, vector<16x8xf32> -> vector<16x8xf32>
    %197 = vector.extract_strided_slice %9 {offsets = [0, 24], sizes = [1, 8], strides = [1, 1]} : vector<1x32xf32> to vector<1x8xf32>
    %198 = vector.broadcast %197 : vector<1x8xf32> to vector<16x8xf32>
    %199 = arith.addf %196, %198 : vector<16x8xf32>
    %200 = vector.shape_cast %187 : vector<16x8xf32> to vector<2x8x8xf32>
    %201 = arith.truncf %200 : vector<2x8x8xf32> to vector<2x8x8xbf16>
    %202 = vector.shape_cast %193 : vector<16x8xf32> to vector<2x8x8xf32>
    %203 = arith.truncf %202 : vector<2x8x8xf32> to vector<2x8x8xbf16>
    %204 = vector.shape_cast %199 : vector<16x8xf32> to vector<2x8x8xf32>
    %205 = arith.truncf %204 : vector<2x8x8xf32> to vector<2x8x8xbf16>
    "tpu.trace_start"() <{level = 10 : i32, message = "bqd,bkd->bqk"}> : () -> ()
    %cst_88 = arith.constant dense<0.000000e+00> : vector<2x8x8xf32>
    %206 = tpu.matmul %201, %203, %cst_88 {dimension_numbers = #tpu.dot_dimension_numbers<[2], [2], [1], [1], [0, 0, 0, 1, 1, 1], [0], [0]>} : vector<2x8x8xbf16>, vector<2x8x8xbf16>, vector<2x8x8xf32> -> vector<2x8x8xf32>
    "tpu.trace_stop"() : () -> ()
    %207 = vector.broadcast %45 : vector<1x8x8xf32> to vector<2x8x8xf32>
    %208 = arith.addf %206, %207 : vector<2x8x8xf32>
    %cst_89 = arith.constant dense<0xFF800000> : vector<2x8xf32>
    %209 = vector.multi_reduction <maximumf>, %208, %cst_89 [2] : vector<2x8x8xf32> to vector<2x8xf32>
    %210 = vector.shape_cast %209 : vector<2x8xf32> to vector<2x8x1xf32>
    %211 = vector.broadcast %210 : vector<2x8x1xf32> to vector<2x8x8xf32>
    %212 = arith.subf %208, %211 : vector<2x8x8xf32>
    %213 = math.exp %212 : vector<2x8x8xf32>
    %cst_90 = arith.constant dense<0.000000e+00> : vector<2x8xf32>
    %214 = vector.multi_reduction <add>, %213, %cst_90 [2] : vector<2x8x8xf32> to vector<2x8xf32>
    %215 = vector.shape_cast %214 : vector<2x8xf32> to vector<2x8x1xf32>
    %216 = tpu.reciprocal %215 {approx = true} : vector<2x8x1xf32> -> vector<2x8x1xf32>
    %217 = vector.broadcast %216 : vector<2x8x1xf32> to vector<2x8x8xf32>
    %218 = arith.mulf %213, %217 : vector<2x8x8xf32>
    %219 = arith.truncf %218 : vector<2x8x8xf32> to vector<2x8x8xbf16>
    "tpu.trace_start"() <{level = 10 : i32, message = "bqk,bkd->bqd"}> : () -> ()
    %cst_91 = arith.constant dense<0.000000e+00> : vector<2x8x8xf32>
    %220 = tpu.matmul %219, %205, %cst_91 {dimension_numbers = #tpu.dot_dimension_numbers<[2], [1], [1], [2], [0, 0, 0, 1, 1, 2], [0], [0]>} : vector<2x8x8xbf16>, vector<2x8x8xbf16>, vector<2x8x8xf32> -> vector<2x8x8xf32>
    "tpu.trace_stop"() : () -> ()
    %221 = vector.shape_cast %220 : vector<2x8x8xf32> to vector<16x8xf32>
    %222 = arith.truncf %221 : vector<16x8xf32> to vector<16x8xbf16>
    %c0_92 = arith.constant 0 : index
    %c3_93 = arith.constant 3 : index
    %c0_94 = arith.constant 0 : index
    %c0_95 = arith.constant 0 : index
    %223 = vector.load %arg4[%c0_92, %c3_93, %c0_94, %c0_95] : memref<1x4x8x32xbf16, #tpu.memory_space<vmem>>, vector<1x1x8x32xbf16>
    %224 = vector.shape_cast %223 : vector<1x1x8x32xbf16> to vector<8x32xbf16>
    %cst_96 = arith.constant dense<0.000000e+00> : vector<16x32xf32>
    %225 = tpu.matmul %222, %224, %cst_96 {dimension_numbers = #tpu.dot_dimension_numbers<[1], [0], [0], [1], [0, 0, 1, 1], [], []>} : vector<16x8xbf16>, vector<8x32xbf16>, vector<16x32xf32> -> vector<16x32xf32>
    %226 = arith.addf %181, %225 : vector<16x32xf32>
    %227 = arith.addf %15, %226 : vector<16x32xf32>
    %228 = vector.broadcast %10 : vector<1x32xf32> to vector<16x32xf32>
    %229 = arith.addf %227, %228 : vector<16x32xf32>
    %cst_97 = arith.constant dense<0.000000e+00> : vector<16xf32>
    %230 = vector.multi_reduction <add>, %229, %cst_97 [1] : vector<16x32xf32> to vector<16xf32>
    %231 = vector.shape_cast %230 : vector<16xf32> to vector<16x1xf32>
    %cst_98 = arith.constant 3.200000e+01 : f32
    %232 = vector.broadcast %cst_98 : f32 to vector<16x1xf32>
    %233 = arith.divf %231, %232 : vector<16x1xf32>
    %234 = vector.broadcast %233 : vector<16x1xf32> to vector<16x32xf32>
    %235 = arith.subf %229, %234 : vector<16x32xf32>
    %236 = arith.mulf %235, %235 : vector<16x32xf32>
    %cst_99 = arith.constant dense<0.000000e+00> : vector<16xf32>
    %237 = vector.multi_reduction <add>, %236, %cst_99 [1] : vector<16x32xf32> to vector<16xf32>
    %238 = vector.shape_cast %237 : vector<16xf32> to vector<16x1xf32>
    %cst_100 = arith.constant 3.200000e+01 : f32
    %239 = vector.broadcast %cst_100 : f32 to vector<16x1xf32>
    %240 = arith.divf %238, %239 : vector<16x1xf32>
    %241 = vector.broadcast %233 : vector<16x1xf32> to vector<16x32xf32>
    %242 = arith.subf %229, %241 : vector<16x32xf32>
    %cst_101 = arith.constant 9.99999974E-6 : f32
    %243 = vector.broadcast %cst_101 : f32 to vector<16x1xf32>
    %244 = arith.addf %240, %243 : vector<16x1xf32>
    %245 = math.rsqrt %244 : vector<16x1xf32>
    %246 = vector.broadcast %245 : vector<16x1xf32> to vector<16x32xf32>
    %247 = arith.mulf %242, %246 : vector<16x32xf32>
    %248 = vector.broadcast %11 : vector<1x32xf32> to vector<16x32xf32>
    %249 = arith.mulf %247, %248 : vector<16x32xf32>
    %250 = vector.broadcast %12 : vector<1x32xf32> to vector<16x32xf32>
    %251 = arith.addf %249, %250 : vector<16x32xf32>
    %252 = arith.truncf %251 : vector<16x32xf32> to vector<16x32xbf16>
    %c0_102 = arith.constant 0 : index
    %c0_103 = arith.constant 0 : index
    %c0_104 = arith.constant 0 : index
    %253 = vector.load %arg5[%c0_102, %c0_103, %c0_104] : memref<1x32x128xbf16, #tpu.memory_space<vmem>>, vector<1x32x128xbf16>
    %254 = vector.shape_cast %253 : vector<1x32x128xbf16> to vector<32x128xbf16>
    %cst_105 = arith.constant dense<0.000000e+00> : vector<16x128xf32>
    %255 = tpu.matmul %252, %254, %cst_105 {dimension_numbers = #tpu.dot_dimension_numbers<[1], [0], [0], [1], [0, 0, 1, 1], [], []>} : vector<16x32xbf16>, vector<32x128xbf16>, vector<16x128xf32> -> vector<16x128xf32>
    %256 = vector.broadcast %13 : vector<1x128xf32> to vector<16x128xf32>
    %257 = arith.addf %255, %256 : vector<16x128xf32>
    %cst_106 = arith.constant 5.000000e-01 : f32
    %258 = vector.broadcast %cst_106 : f32 to vector<16x128xf32>
    %259 = arith.mulf %258, %257 : vector<16x128xf32>
    %cst_107 = arith.constant 4.471500e-02 : f32
    %260 = vector.broadcast %cst_107 : f32 to vector<16x128xf32>
    %261 = arith.mulf %260, %257 : vector<16x128xf32>
    %262 = arith.mulf %261, %257 : vector<16x128xf32>
    %263 = arith.mulf %262, %257 : vector<16x128xf32>
    %264 = arith.addf %257, %263 : vector<16x128xf32>
    %cst_108 = arith.constant 0.797884583 : f32
    %265 = vector.broadcast %cst_108 : f32 to vector<16x128xf32>
    %266 = arith.mulf %265, %264 : vector<16x128xf32>
    %267 = math.tanh %266 : vector<16x128xf32>
    %cst_109 = arith.constant 1.000000e+00 : f32
    %268 = vector.broadcast %cst_109 : f32 to vector<16x128xf32>
    %269 = arith.addf %268, %267 : vector<16x128xf32>
    %270 = arith.mulf %259, %269 : vector<16x128xf32>
    %271 = arith.truncf %270 : vector<16x128xf32> to vector<16x128xbf16>
    %c0_110 = arith.constant 0 : index
    %c0_111 = arith.constant 0 : index
    %c0_112 = arith.constant 0 : index
    %272 = vector.load %arg6[%c0_110, %c0_111, %c0_112] : memref<1x128x32xbf16, #tpu.memory_space<vmem>>, vector<1x128x32xbf16>
    %273 = vector.shape_cast %272 : vector<1x128x32xbf16> to vector<128x32xbf16>
    %cst_113 = arith.constant dense<0.000000e+00> : vector<16x32xf32>
    %274 = tpu.matmul %271, %273, %cst_113 {dimension_numbers = #tpu.dot_dimension_numbers<[1], [0], [0], [1], [0, 0, 1, 1], [], []>} : vector<16x128xbf16>, vector<128x32xbf16>, vector<16x32xf32> -> vector<16x32xf32>
    %275 = vector.broadcast %14 : vector<1x32xf32> to vector<16x32xf32>
    %276 = arith.addf %274, %275 : vector<16x32xf32>
    %277 = arith.addf %229, %276 : vector<16x32xf32>
    %c0_114 = arith.constant 0 : index
    %c0_115 = arith.constant 0 : index
    %278 = vector.load %arg7[%c0_114, %c0_115] : memref<16x32xf32, #tpu.memory_space<vmem>>, vector<16x32xf32>
    tpu.vector_store %arg7[%c0_114, %c0_115], %277 {strides = array<i32>} : memref<16x32xf32, #tpu.memory_space<vmem>>, vector<16x32xf32>,
    return
  }
  func.func @transform_0(%arg0: i32) -> (i32, i32) {
    %c0_i32 = arith.constant 0 : i32
    %c0_i32_0 = arith.constant 0 : i32
    %c0_i32_1 = arith.constant 0 : i32
    return %c0_i32, %c0_i32_0 : i32, i32
  }
  func.func @transform_1(%arg0: i32) -> (i32, i32, i32) {
    %c0_i32 = arith.constant 0 : i32
    %c0_i32_0 = arith.constant 0 : i32
    %c0_i32_1 = arith.constant 0 : i32
    return %arg0, %c0_i32, %c0_i32_0 : i32, i32, i32
  }
  func.func @transform_2(%arg0: i32) -> (i32, i32, i32, i32) {
    %c0_i32 = arith.constant 0 : i32
    %c0_i32_0 = arith.constant 0 : i32
    %c0_i32_1 = arith.constant 0 : i32
    %c0_i32_2 = arith.constant 0 : i32
    return %arg0, %c0_i32, %c0_i32_0, %c0_i32_1 : i32, i32, i32, i32
  }
  func.func @transform_3(%arg0: i32) -> (i32, i32, i32, i32) {
    %c0_i32 = arith.constant 0 : i32
    %c0_i32_0 = arith.constant 0 : i32
    %c0_i32_1 = arith.constant 0 : i32
    %c0_i32_2 = arith.constant 0 : i32
    return %arg0, %c0_i32, %c0_i32_0, %c0_i32_1 : i32, i32, i32, i32
  }
  func.func @transform_4(%arg0: i32) -> (i32, i32, i32) {
    %c0_i32 = arith.constant 0 : i32
    %c0_i32_0 = arith.constant 0 : i32
    %c0_i32_1 = arith.constant 0 : i32
    return %arg0, %c0_i32, %c0_i32_0 : i32, i32, i32
  }
  func.func @transform_5(%arg0: i32) -> (i32, i32, i32) {
    %c0_i32 = arith.constant 0 : i32
    %c0_i32_0 = arith.constant 0 : i32
    %c0_i32_1 = arith.constant 0 : i32
    return %arg0, %c0_i32, %c0_i32_0 : i32, i32, i32
  }
  func.func @transform_6(%arg0: i32) -> (i32, i32) {
    %c0_i32 = arith.constant 0 : i32
    %c0_i32_0 = arith.constant 0 : i32
    %c0_i32_1 = arith.constant 0 : i32
    return %c0_i32, %c0_i32_0 : i32, i32
  }
}

</mosaic_0001>

<llo_original>
// kernel: gpt_layers_forward.1
$region0: #{gpt_layers_forward.1}
  #allocation0 [shape = 'u32[]', space=smem, size = 0x4, offset = 0x4, fixed_abs, tag = 'smem constant byte address 0x4 - core index']
  #allocation1 [shape = 'u32[144,128]{1,0:T(1,128)}', space=vmem, size = 0x12000, scoped, tag = 'internal scratch']
  %s0 = inlined_call_operand.vmem [shape: f32[16,32], index: 0, kind: input, shape index: {}, may-alias: {0,6}]
  %s1 = inlined_call_operand.vmem [shape: f32[2,10,128], index: 1, kind: input, shape index: {}]
  %s2 = inlined_call_operand.vmem [shape: bf16[2,12,32,8], index: 2, kind: input, shape index: {}]
  %s3 = inlined_call_operand.vmem [shape: bf16[2,4,8,32], index: 3, kind: input, shape index: {}]
  %s4 = inlined_call_operand.vmem [shape: bf16[2,32,128], index: 4, kind: input, shape index: {}]
  %s5 = inlined_call_operand.vmem [shape: bf16[2,128,32], index: 5, kind: input, shape index: {}]
  %s6 = inlined_call_operand.vmem [shape: f32[16,32], index: 6, kind: output, shape index: {}, may-alias: {0,6}]
  %s7 = sld [smem:[#allocation0]]
  $region61: #{gpt_layers_forward.1} parent=0
    _
  %s9 = ssub.s32 1, %s7
  %s10 = scalar_select 0, %s9, %s7
  loop: start=0, step=1, limit=4
  $region2: #{gpt_layers_forward.1} parent=0 // loop_pre_header
    _
  $region3: #{gpt_layers_forward.1} parent=0 // loop_header
    %s12 = sphi 0, %s16
    %p13 = scmp.ge.s32.totalorder %s12, 4
    %s20 = sphi 0, %s20
    %s22 = sphi 0, %s20
    %s23 = sphi 0, %s22
    %s37 = sphi 0, %s23
    %s43 = sphi 0, %s45
    %s46 = sphi 0, %s43
    %s47 = sphi 0, %s46
    %s63 = sphi 0, %s47
    %s69 = sphi 0, %s71
    %s72 = sphi 0, %s69
    %s73 = sphi 0, %s72
    %s89 = sphi 0, %s73
    %s95 = sphi 0, %s97
    %s98 = sphi 0, %s95
    %s99 = sphi 0, %s98
    %s115 = sphi 0, %s99
    %s121 = sphi 0, %s123
    %s124 = sphi 0, %s121
    %s125 = sphi 0, %s124
    %s141 = sphi 0, %s125
    %s147 = sphi 0, %s149
    %s150 = sphi 0, %s147
    %s151 = sphi 0, %s150
    %s167 = sphi 0, %s151
    %s171 = sphi 0, %s171
    %s173 = sphi 0, %s171
    %s174 = sphi 0, %s173
    %s188 = sphi 0, %s174
  $region4: #{gpt_layers_forward.1} parent=0 // loop_header_branch
    %15 = sbr.rel (%p13) target = $region8
  $region5: #{gpt_layers_forward.1} parent=0 // loop_body
    %s17 = ssub.s32 %s12, 1
    %s18 = ssub.s32 %s12, 2
    %s19 = sadd.s32 %s12, 1
    %s21 = sadd.s32 %s20, 1
    %p24 = scmp.eq.s32.totalorder %s12, 1
    %p25 = scmp.ne.s32.totalorder %s20, %s22
    %p26 = scmp.eq.s32.totalorder %s12, 0
    %p27 = por %p25, %p26
    %p28 = scmp.ne.s32.totalorder %s20, %s22
    %p29 = scmp.eq.s32.totalorder %s17, 1
    %p30 = por %p28, %p29
    %p31 = scmp.ne.s32.totalorder %s22, %s23
    %p32 = scmp.eq.s32.totalorder %s17, 0
    %p33 = por %p31, %p32
    %p34 = scmp.ne.s32.totalorder %s22, %s23
    %p35 = scmp.eq.s32.totalorder %s18, 1
    %p36 = por %p34, %p35
    %p38 = scmp.ne.s32.totalorder %s23, %s37
    %p39 = scmp.eq.s32.totalorder %s18, 0
    %p40 = por %p38, %p39
    %s41 = ssub.s32 %s12, %s19
    %p42 = scmp.eq.s32.totalorder %s41, 0
    %s44 = sadd.s32 %s43, 1
    %s45 = scalar_select %p42, %s43, %s44
    %p48 = pneg %p42
    %p49 = scmp.eq.s32.totalorder %s12, 1
    %p50 = por %p48, %p49
    %p51 = scmp.ne.s32.totalorder %s43, %s46
    %p52 = scmp.eq.s32.totalorder %s12, 0
    %p53 = por %p51, %p52
    %p54 = scmp.ne.s32.totalorder %s43, %s46
    %p55 = scmp.eq.s32.totalorder %s17, 1
    %p56 = por %p54, %p55
    %p57 = scmp.ne.s32.totalorder %s46, %s47
    %p58 = scmp.eq.s32.totalorder %s17, 0
    %p59 = por %p57, %p58
    %p60 = scmp.ne.s32.totalorder %s46, %s47
    %p61 = scmp.eq.s32.totalorder %s18, 1
    %p62 = por %p60, %p61
    %p64 = scmp.ne.s32.totalorder %s47, %s63
    %p65 = scmp.eq.s32.totalorder %s18, 0
    %p66 = por %p64, %p65
    %s67 = ssub.s32 %s12, %s19
    %p68 = scmp.eq.s32.totalorder %s67, 0
    %s70 = sadd.s32 %s69, 1
    %s71 = scalar_select %p68, %s69, %s70
    %p74 = pneg %p68
    %p75 = scmp.eq.s32.totalorder %s12, 1
    %p76 = por %p74, %p75
    %p77 = scmp.ne.s32.totalorder %s69, %s72
    %p78 = scmp.eq.s32.totalorder %s12, 0
    %p79 = por %p77, %p78
    %p80 = scmp.ne.s32.totalorder %s69, %s72
    %p81 = scmp.eq.s32.totalorder %s17, 1
    %p82 = por %p80, %p81
    %p83 = scmp.ne.s32.totalorder %s72, %s73
    %p84 = scmp.eq.s32.totalorder %s17, 0
    %p85 = por %p83, %p84
    %p86 = scmp.ne.s32.totalorder %s72, %s73
    %p87 = scmp.eq.s32.totalorder %s18, 1
    %p88 = por %p86, %p87
    %p90 = scmp.ne.s32.totalorder %s73, %s89
    %p91 = scmp.eq.s32.totalorder %s18, 0
    %p92 = por %p90, %p91
    %s93 = ssub.s32 %s12, %s19
    %p94 = scmp.eq.s32.totalorder %s93, 0
    %s96 = sadd.s32 %s95, 1
    %s97 = scalar_select %p94, %s95, %s96
    %p100 = pneg %p94
    %p101 = scmp.eq.s32.totalorder %s12, 1
    %p102 = por %p100, %p101
    %p103 = scmp.ne.s32.totalorder %s95, %s98
    %p104 = scmp.eq.s32.totalorder %s12, 0
    %p105 = por %p103, %p104
    %p106 = scmp.ne.s32.totalorder %s95, %s98
    %p107 = scmp.eq.s32.totalorder %s17, 1
    %p108 = por %p106, %p107
    %p109 = scmp.ne.s32.totalorder %s98, %s99
    %p110 = scmp.eq.s32.totalorder %s17, 0
    %p111 = por %p109, %p110
    %p112 = scmp.ne.s32.totalorder %s98, %s99
    %p113 = scmp.eq.s32.totalorder %s18, 1
    %p114 = por %p112, %p113
    %p116 = scmp.ne.s32.totalorder %s99, %s115
    %p117 = scmp.eq.s32.totalorder %s18, 0
    %p118 = por %p116, %p117
    %s119 = ssub.s32 %s12, %s19
    %p120 = scmp.eq.s32.totalorder %s119, 0
    %s122 = sadd.s32 %s121, 1
    %s123 = scalar_select %p120, %s121, %s122
    %p126 = pneg %p120
    %p127 = scmp.eq.s32.totalorder %s12, 1
    %p128 = por %p126, %p127
    %p129 = scmp.ne.s32.totalorder %s121, %s124
    %p130 = scmp.eq.s32.totalorder %s12, 0
    %p131 = por %p129, %p130
    %p132 = scmp.ne.s32.totalorder %s121, %s124
    %p133 = scmp.eq.s32.totalorder %s17, 1
    %p134 = por %p132, %p133
    %p135 = scmp.ne.s32.totalorder %s124, %s125
    %p136 = scmp.eq.s32.totalorder %s17, 0
    %p137 = por %p135, %p136
    %p138 = scmp.ne.s32.totalorder %s124, %s125
    %p139 = scmp.eq.s32.totalorder %s18, 1
    %p140 = por %p138, %p139
    %p142 = scmp.ne.s32.totalorder %s125, %s141
    %p143 = scmp.eq.s32.totalorder %s18, 0
    %p144 = por %p142, %p143
    %s145 = ssub.s32 %s12, %s19
    %p146 = scmp.eq.s32.totalorder %s145, 0
    %s148 = sadd.s32 %s147, 1
    %s149 = scalar_select %p146, %s147, %s148
    %p152 = pneg %p146
    %p153 = scmp.eq.s32.totalorder %s12, 1
    %p154 = por %p152, %p153
    %p155 = scmp.ne.s32.totalorder %s147, %s150
    %p156 = scmp.eq.s32.totalorder %s12, 0
    %p157 = por %p155, %p156
    %p158 = scmp.ne.s32.totalorder %s147, %s150
    %p159 = scmp.eq.s32.totalorder %s17, 1
    %p160 = por %p158, %p159
    %p161 = scmp.ne.s32.totalorder %s150, %s151
    %p162 = scmp.eq.s32.totalorder %s17, 0
    %p163 = por %p161, %p162
    %p164 = scmp.ne.s32.totalorder %s150, %s151
    %p165 = scmp.eq.s32.totalorder %s18, 1
    %p166 = por %p164, %p165
    %p168 = scmp.ne.s32.totalorder %s151, %s167
    %p169 = scmp.eq.s32.totalorder %s18, 0
    %p170 = por %p168, %p169
    %s172 = sadd.s32 %s171, 1
    %p175 = scmp.eq.s32.totalorder %s12, 1
    %p176 = scmp.ne.s32.totalorder %s171, %s173
    %p177 = scmp.eq.s32.totalorder %s12, 0
    %p178 = por %p176, %p177
    %p179 = scmp.ne.s32.totalorder %s171, %s173
    %p180 = scmp.eq.s32.totalorder %s17, 1
    %p181 = por %p179, %p180
    %p182 = scmp.ne.s32.totalorder %s173, %s174
    %p183 = scmp.eq.s32.totalorder %s17, 0
    %p184 = por %p182, %p183
    %p185 = scmp.ne.s32.totalorder %s173, %s174
    %p186 = scmp.eq.s32.totalorder %s18, 1
    %p187 = por %p185, %p186
    %p189 = scmp.ne.s32.totalorder %s174, %s188
    %p190 = scmp.eq.s32.totalorder %s18, 0
    %p191 = por %p189, %p190
    %p192 = scmp.le.s32.totalorder 1, %s12
    %p193 = scmp.lt.s32.totalorder %s12, 3
    %p194 = pnand %p192, %p193
    %p195 = pneg %p194
    // Predicated region
    $region9: #{gpt_layers_forward.1} parent=5 // pred_check
      _
    $region10: #{gpt_layers_forward.1} parent=5 // pred_check_branch
      %197 = sbr.rel (%p194) target = $region12
    $region11: #{gpt_layers_forward.1} parent=5 // pred_region
      %s198 = ssub.s32 %s12, 1
      // Predicated region
      $region13: #{gpt_layers_forward.1} parent=11 // pred_check
        %p199 = pneg %p33
      $region14: #{gpt_layers_forward.1} parent=11 // pred_check_branch
        %201 = sbr.rel (%p199) target = $region16
      $region15: #{gpt_layers_forward.1} parent=11 // pred_region
        _
      $region16: #{gpt_layers_forward.1} parent=11 // pred_fallthru
        _
    $region12: #{gpt_layers_forward.1} parent=5 // pred_fallthru
      _
    %p202 = scmp.lt.s32.totalorder %s12, 2
    // Predicated region
    $region17: #{gpt_layers_forward.1} parent=5 // pred_check
      %p203 = pneg %p202
    $region18: #{gpt_layers_forward.1} parent=5 // pred_check_branch
      %205 = sbr.rel (%p203) target = $region20
    $region19: #{gpt_layers_forward.1} parent=5 // pred_region
      // Predicated region
      $region21: #{gpt_layers_forward.1} parent=19 // pred_check
        %p206 = pneg %p53
      $region22: #{gpt_layers_forward.1} parent=19 // pred_check_branch
        %208 = sbr.rel (%p206) target = $region24
      $region23: #{gpt_layers_forward.1} parent=19 // pred_region
        %p209 = scmp.lt.s32.totalorder %s12, 1
        %s210 = scalar_select %p209, %s12, 1
        %s211 = smul.addr %s210, 2
        %s212 = smul.addr %s211, 8
        %s213 = scalar_lea.vmem %s1, %s212
      $region24: #{gpt_layers_forward.1} parent=19 // pred_fallthru
        _
      // Predicated region
      $region25: #{gpt_layers_forward.1} parent=19 // pred_check
        %p214 = pneg %p79
      $region26: #{gpt_layers_forward.1} parent=19 // pred_check_branch
        %216 = sbr.rel (%p214) target = $region28
      $region27: #{gpt_layers_forward.1} parent=19 // pred_region
        %p217 = scmp.lt.s32.totalorder %s12, 1
        %s218 = scalar_select %p217, %s12, 1
        %s219 = smul.addr %s218, 48
        %s220 = smul.addr %s219, 4
        %s221 = scalar_lea.vmem %s2, %s220
      $region28: #{gpt_layers_forward.1} parent=19 // pred_fallthru
        _
      // Predicated region
      $region29: #{gpt_layers_forward.1} parent=19 // pred_check
        %p222 = pneg %p105
      $region30: #{gpt_layers_forward.1} parent=19 // pred_check_branch
        %224 = sbr.rel (%p222) target = $region32
      $region31: #{gpt_layers_forward.1} parent=19 // pred_region
        %p225 = scmp.lt.s32.totalorder %s12, 1
        %s226 = scalar_select %p225, %s12, 1
        %s227 = smul.addr %s226, 4
        %s228 = smul.addr %s227, 4
        %s229 = scalar_lea.vmem %s3, %s228
      $region32: #{gpt_layers_forward.1} parent=19 // pred_fallthru
        _
      // Predicated region
      $region33: #{gpt_layers_forward.1} parent=19 // pred_check
        %p230 = pneg %p131
      $region34: #{gpt_layers_forward.1} parent=19 // pred_check_branch
        %232 = sbr.rel (%p230) target = $region36
      $region35: #{gpt_layers_forward.1} parent=19 // pred_region
        %p233 = scmp.lt.s32.totalorder %s12, 1
        %s234 = scalar_select %p233, %s12, 1
        %s235 = smul.addr %s234, 4
        %s236 = smul.addr %s235, 4
        %s237 = scalar_lea.vmem %s4, %s236
      $region36: #{gpt_layers_forward.1} parent=19 // pred_fallthru
        _
      // Predicated region
      $region37: #{gpt_layers_forward.1} parent=19 // pred_check
        %p238 = pneg %p157
      $region38: #{gpt_layers_forward.1} parent=19 // pred_check_branch
        %240 = sbr.rel (%p238) target = $region40
      $region39: #{gpt_layers_forward.1} parent=19 // pred_region
        %p241 = scmp.lt.s32.totalorder %s12, 1
        %s242 = scalar_select %p241, %s12, 1
        %s243 = smul.addr %s242, 16
        %s244 = smul.addr %s243, 4
        %s245 = scalar_lea.vmem %s5, %s244
      $region40: #{gpt_layers_forward.1} parent=19 // pred_fallthru
        _
    $region20: #{gpt_layers_forward.1} parent=5 // pred_fallthru
      _
    %p246 = scmp.le.s32.totalorder 1, %s12
    %p247 = scmp.lt.s32.totalorder %s12, 3
    %p248 = pnand %p246, %p247
    %p249 = pneg %p248
    // Predicated region
    $region41: #{gpt_layers_forward.1} parent=5 // pred_check
      _
    $region42: #{gpt_layers_forward.1} parent=5 // pred_check_branch
      %251 = sbr.rel (%p248) target = $region44
    $region43: #{gpt_layers_forward.1} parent=5 // pred_region
      %s252 = ssub.s32 %s12, 1
      %p253 = pneg %p33
      %p254 = pneg %p30
      %p255 = scmp.lt.s32.totalorder %s17, 1
      %s256 = scalar_select %p255, %s17, 1
      %s257 = smul.addr %s256, 2
      %s258 = smul.addr %s257, 8
      %s259 = scalar_lea.vmem %s1, %s258
      %p260 = pneg %p59
      %p261 = pneg %p56
      %p262 = scmp.lt.s32.totalorder %s17, 1
      %s263 = scalar_select %p262, %s17, 1
      %s264 = smul.addr %s263, 48
      %s265 = smul.addr %s264, 4
      %s266 = scalar_lea.vmem %s2, %s265
      %p267 = pneg %p85
      %p268 = pneg %p82
      %p269 = scmp.lt.s32.totalorder %s17, 1
      %s270 = scalar_select %p269, %s17, 1
      %s271 = smul.addr %s270, 4
      %s272 = smul.addr %s271, 4
      %s273 = scalar_lea.vmem %s3, %s272
      %p274 = pneg %p111
      %p275 = pneg %p108
      %p276 = scmp.lt.s32.totalorder %s17, 1
      %s277 = scalar_select %p276, %s17, 1
      %s278 = smul.addr %s277, 4
      %s279 = smul.addr %s278, 4
      %s280 = scalar_lea.vmem %s4, %s279
      %p281 = pneg %p137
      %p282 = pneg %p134
      %p283 = scmp.lt.s32.totalorder %s17, 1
      %s284 = scalar_select %p283, %s17, 1
      %s285 = smul.addr %s284, 16
      %s286 = smul.addr %s285, 4
      %s287 = scalar_lea.vmem %s5, %s286
      %p288 = pneg %p163
      %p289 = pneg %p160
      %p290 = pneg %p184
      %p291 = pneg %p181
      %p292 = scmp.lt.s32.totalorder %s17, 1
      %s293 = scalar_select %p292, %s17, 1
      %s294 = smul.addr %s293, 2
      %s295 = smul.addr %s294, 8
      %s296 = scalar_lea.vmem %s1, %s295
      %p297 = scmp.lt.s32.totalorder %s17, 1
      %s298 = scalar_select %p297, %s17, 1
      %s299 = smul.addr %s298, 48
      %s300 = smul.addr %s299, 4
      %s301 = scalar_lea.vmem %s2, %s300
      %p302 = scmp.lt.s32.totalorder %s17, 1
      %s303 = scalar_select %p302, %s17, 1
      %s304 = smul.addr %s303, 4
      %s305 = smul.addr %s304, 4
      %s306 = scalar_lea.vmem %s3, %s305
      %p307 = scmp.lt.s32.totalorder %s17, 1
      %s308 = scalar_select %p307, %s17, 1
      %s309 = smul.addr %s308, 4
      %s310 = smul.addr %s309, 4
      %s311 = scalar_lea.vmem %s4, %s310
      %p312 = scmp.lt.s32.totalorder %s17, 1
      %s313 = scalar_select %p312, %s17, 1
      %s314 = smul.addr %s313, 16
      %s315 = smul.addr %s314, 4
      %s316 = scalar_lea.vmem %s5, %s315
      %p318 = scmp.eq.s32.totalorder %s17, 0
      // Predicated region
      $region45: #{gpt_layers_forward.1} parent=43 // pred_check
        %p319 = pneg %p318
      $region46: #{gpt_layers_forward.1} parent=43 // pred_check_branch
        %321 = sbr.rel (%p319) target = $region48
      $region47: #{gpt_layers_forward.1} parent=43 // pred_region
        %v322 = vld [vmem:[%s0] sm:$0xff]
        %v323 = vld [vmem:[%s0 + $0x8] sm:$0xff]
        %vm324 = vcmask 261120
        %325 = vst.msk [vmem:[%s6] sm:$0xff] %vm324, %v322
        %326 = vst.msk [vmem:[%s6 + $0x8] sm:$0xff] %vm324, %v323
      $region48: #{gpt_layers_forward.1} parent=43 // pred_fallthru
        _
      %v327 = vld [vmem:[%s296] sm:$0xff]
      %v328 = vld [vmem:[%s296 + $0x8] sm:$0x3]
      %v329 = vld [vmem:[%s6] sm:$0xff]
      %v330 = vld [vmem:[%s6 + $0x8] sm:$0xff]
      %vm331 = vcmask 261120
      %v332 = vsel %vm331, %v329, 0.0
      %333 = vadd.xlane.f32.xlu0 %v332
      %v334 = vpop.xlane.xlu0 %333
      %v335 = vsel %vm331, %v330, 0.0
      %336 = vadd.xlane.f32.xlu0 %v335
      %v337 = vpop.xlane.xlu0 %336
      %v338 = vrcp.pop 32.0
      %v339 = vmul.f32 %v334, %v338
      %v340 = vmul.f32 %v337, %v338
      %v341 = vsub.f32 %v329, %v339
      %v342 = vsub.f32 %v330, %v340
      %v343 = vmul.f32 %v341, %v341
      %v344 = vmul.f32 %v342, %v342
      %v345 = vsel %vm331, %v343, 0.0
      %346 = vadd.xlane.f32.xlu0 %v345
      %v347 = vpop.xlane.xlu0 %346
      %v348 = vsel %vm331, %v344, 0.0
      %349 = vadd.xlane.f32.xlu0 %v348
      %v350 = vpop.xlane.xlu0 %349
      %v351 = vmul.f32 %v347, %v338
      %v352 = vmul.f32 %v350, %v338
      %v353 = vadd.f32 %v351, 1e-05
      %v354 = vadd.f32 %v352, 1e-05
      %v355 = vrsqrt.pop %v353
      %v356 = vrsqrt.pop %v354
      %v357 = vmul.f32 %v341, %v355
      %v358 = vmul.f32 %v342, %v356
      %v359 = vlaneseq
      %v360 = vshrl.u32 %v359, 7
      %v361 = vsub.s32 0, %v360
      %v362 = vrot.slane %v327, %v361
      %v363 = vmul.f32 %v357, %v362
      %v364 = vmul.f32 %v358, %v362
      %v365 = vlaneseq
      %v366 = vshrl.u32 %v365, 7
      %v367 = vsub.s32 1, %v366
      %v368 = vrot.slane %v327, %v367
      %v369 = vadd.f32 %v363, %v368
      %v370 = vadd.f32 %v364, %v368
      %v371 = vpack.c.bf16 %v370, %v369
      %v372 = vlaneseq
      %v373 = vshrl.u32 %v372, 7
      %v374 = vlaneseq
      %v375 = vand.u32 %v374, 127
      %vm376 = vcmp.gt.s32.totalorder %v375, %v373
      %v377 = vsel %vm376, -1e+09, 0.0
      %v378 = vld [vmem:[%s301] sm:$0xf]
      %v379 = vld [vmem:[%s301 + $0x4] sm:$0xf]
      %v380 = vld [vmem:[%s301 + $0x8] sm:$0xf]
      %v381 = vld [vmem:[%s301 + $0xc] sm:$0xf]
      %v382 = vlaneseq
      %v383 = vshrl.u32 %v382, 7
      %v384 = vsub.s32 2, %v383
      %v385 = vrot.slane %v327, %v384
      %v390 = vunpack.c.l.b16 %v378
      %v391 = vunpack.c.l.b16 %v379
      %v392 = vunpack.c.l.b16 %v380
      %v393 = vunpack.c.l.b16 %v381
      %v394 = vpack.c.b16 %v391, %v390
      %v395 = vpack.c.b16 %v393, %v392
      %v399 = vsel %vm331, %v371, 0
      %401 = vmatprep.subr.bf16.mxu0 0
      %402 = vmatpush1.bf16.msra.mxu0 0
      %403 = vmatprep.subr.bf16.mxu0 0
      %404 = vmatpush1.bf16.msra.mxu0 0
      %405 = vmatprep.subr.bf16.mxu0 0
      %406 = vmatpush1.bf16.msra.mxu0 0
      %407 = vmatprep.subr.bf16.mxu0 0
      %408 = vmatpush1.bf16.msra.mxu0 0
      %409 = vmatprep.subr.bf16.mxu0 0
      %410 = vmatpush1.bf16.msra.mxu0 0
      %411 = vmatprep.subr.bf16.mxu0 0
      %412 = vmatpush1.bf16.msra.mxu0 0
      %413 = vmatprep.subr.bf16.mxu0 0
      %414 = vmatpush1.bf16.msra.mxu0 %v395
      %415 = vmatprep.subr.bf16.mxu0 0
      %416 = vmatpush1.bf16.msra.mxu0 %v394
      %417 = vmatprep.subr.bf16.mxu0 0
      %418 = vmatpush2.bf16.msra.mxu0 0
      %419 = vmatprep.subr.bf16.mxu0 0
      %420 = vmatpush2.bf16.msra.mxu0 0
      %421 = vmatprep.subr.bf16.mxu0 0
      %422 = vmatpush2.bf16.msra.mxu0 0
      %423 = vmatprep.subr.bf16.mxu0 0
      %424 = vmatpush2.bf16.msra.mxu0 0
      %425 = vmatprep.subr.bf16.mxu0 0
      %426 = vmatpush2.bf16.msra.mxu0 0
      %427 = vmatprep.subr.bf16.mxu0 0
      %428 = vmatpush2.bf16.msra.mxu0 0
      %429 = vmatprep.subr.bf16.mxu0 0
      %430 = vmatpush2.bf16.msra.mxu0 0
      %431 = vmatprep.subr.bf16.mxu0 0
      %432 = vmatpush2.bf16.msra.mxu0 0
      %433 = vmatprep.mubr.bf16.mxu0 0
      %434 = vmatmul.mubr.bf16.gmra.mxu0 %v399
      %v435 = vpop.f32.mrf.mxu0
      %v436 = vadd.f32 %v385, %v435
      %v437 = vpop.f32.mrf.mxu0
      %v438 = vpop.f32.mrf.mxu0
      %v439 = vadd.f32 %v385, %v438
      %v440 = vpop.f32.mrf.mxu0
      %441 = vdwg.mxu0
      %s442 = scalar_lea.vmem %s301, 64
      %v443 = vld [vmem:[%s442] sm:$0xf]
      %v444 = vld [vmem:[%s442 + $0x4] sm:$0xf]
      %v445 = vld [vmem:[%s442 + $0x8] sm:$0xf]
      %v446 = vld [vmem:[%s442 + $0xc] sm:$0xf]
      %v447 = vlaneseq
      %v448 = vshrl.u32 %v447, 7
      %v449 = vsub.s32 3, %v448
      %v450 = vrot.slane %v327, %v449
      %v455 = vunpack.c.l.b16 %v443
      %v456 = vunpack.c.l.b16 %v444
      %v457 = vunpack.c.l.b16 %v445
      %v458 = vunpack.c.l.b16 %v446
      %v459 = vpack.c.b16 %v456, %v455
      %v460 = vpack.c.b16 %v458, %v457
      %463 = vmatprep.subr.bf16.mxu0 0
      %464 = vmatpush1.bf16.msra.mxu0 0
      %465 = vmatprep.subr.bf16.mxu0 0
      %466 = vmatpush1.bf16.msra.mxu0 0
      %467 = vmatprep.subr.bf16.mxu0 0
      %468 = vmatpush1.bf16.msra.mxu0 0
      %469 = vmatprep.subr.bf16.mxu0 0
      %470 = vmatpush1.bf16.msra.mxu0 0
      %471 = vmatprep.subr.bf16.mxu0 0
      %472 = vmatpush1.bf16.msra.mxu0 0
      %473 = vmatprep.subr.bf16.mxu0 0
      %474 = vmatpush1.bf16.msra.mxu0 0
      %475 = vmatprep.subr.bf16.mxu0 0
      %476 = vmatpush1.bf16.msra.mxu0 %v460
      %477 = vmatprep.subr.bf16.mxu0 0
      %478 = vmatpush1.bf16.msra.mxu0 %v459
      %479 = vmatprep.subr.bf16.mxu0 0
      %480 = vmatpush2.bf16.msra.mxu0 0
      %481 = vmatprep.subr.bf16.mxu0 0
      %482 = vmatpush2.bf16.msra.mxu0 0
      %483 = vmatprep.subr.bf16.mxu0 0
      %484 = vmatpush2.bf16.msra.mxu0 0
      %485 = vmatprep.subr.bf16.mxu0 0
      %486 = vmatpush2.bf16.msra.mxu0 0
      %487 = vmatprep.subr.bf16.mxu0 0
      %488 = vmatpush2.bf16.msra.mxu0 0
      %489 = vmatprep.subr.bf16.mxu0 0
      %490 = vmatpush2.bf16.msra.mxu0 0
      %491 = vmatprep.subr.bf16.mxu0 0
      %492 = vmatpush2.bf16.msra.mxu0 0
      %493 = vmatprep.subr.bf16.mxu0 0
      %494 = vmatpush2.bf16.msra.mxu0 0
      %495 = vmatprep.mubr.bf16.mxu0 0
      %496 = vmatmul.mubr.bf16.gmra.mxu0 %v399
      %v497 = vpop.f32.mrf.mxu0
      %v498 = vadd.f32 %v450, %v497
      %v499 = vpop.f32.mrf.mxu0
      %v500 = vpop.f32.mrf.mxu0
      %v501 = vadd.f32 %v450, %v500
      %v502 = vpop.f32.mrf.mxu0
      %503 = vdwg.mxu0
      %s504 = scalar_lea.vmem %s301, 128
      %v505 = vld [vmem:[%s504] sm:$0xf]
      %v506 = vld [vmem:[%s504 + $0x4] sm:$0xf]
      %v507 = vld [vmem:[%s504 + $0x8] sm:$0xf]
      %v508 = vld [vmem:[%s504 + $0xc] sm:$0xf]
      %v509 = vlaneseq
      %v510 = vshrl.u32 %v509, 7
      %v511 = vsub.s32 4, %v510
      %v512 = vrot.slane %v327, %v511
      %v517 = vunpack.c.l.b16 %v505
      %v518 = vunpack.c.l.b16 %v506
      %v519 = vunpack.c.l.b16 %v507
      %v520 = vunpack.c.l.b16 %v508
      %v521 = vpack.c.b16 %v518, %v517
      %v522 = vpack.c.b16 %v520, %v519
      %525 = vmatprep.subr.bf16.mxu0 0
      %526 = vmatpush1.bf16.msra.mxu0 0
      %527 = vmatprep.subr.bf16.mxu0 0
      %528 = vmatpush1.bf16.msra.mxu0 0
      %529 = vmatprep.subr.bf16.mxu0 0
      %530 = vmatpush1.bf16.msra.mxu0 0
      %531 = vmatprep.subr.bf16.mxu0 0
      %532 = vmatpush1.bf16.msra.mxu0 0
      %533 = vmatprep.subr.bf16.mxu0 0
      %534 = vmatpush1.bf16.msra.mxu0 0
      %535 = vmatprep.subr.bf16.mxu0 0
      %536 = vmatpush1.bf16.msra.mxu0 0
      %537 = vmatprep.subr.bf16.mxu0 0
      %538 = vmatpush1.bf16.msra.mxu0 %v522
      %539 = vmatprep.subr.bf16.mxu0 0
      %540 = vmatpush1.bf16.msra.mxu0 %v521
      %541 = vmatprep.subr.bf16.mxu0 0
      %542 = vmatpush2.bf16.msra.mxu0 0
      %543 = vmatprep.subr.bf16.mxu0 0
      %544 = vmatpush2.bf16.msra.mxu0 0
      %545 = vmatprep.subr.bf16.mxu0 0
      %546 = vmatpush2.bf16.msra.mxu0 0
      %547 = vmatprep.subr.bf16.mxu0 0
      %548 = vmatpush2.bf16.msra.mxu0 0
      %549 = vmatprep.subr.bf16.mxu0 0
      %550 = vmatpush2.bf16.msra.mxu0 0
      %551 = vmatprep.subr.bf16.mxu0 0
      %552 = vmatpush2.bf16.msra.mxu0 0
      %553 = vmatprep.subr.bf16.mxu0 0
      %554 = vmatpush2.bf16.msra.mxu0 0
      %555 = vmatprep.subr.bf16.mxu0 0
      %556 = vmatpush2.bf16.msra.mxu0 0
      %557 = vmatprep.mubr.bf16.mxu0 0
      %558 = vmatmul.mubr.bf16.gmra.mxu0 %v399
      %v559 = vpop.f32.mrf.mxu0
      %v560 = vadd.f32 %v512, %v559
      %v561 = vpop.f32.mrf.mxu0
      %v562 = vpop.f32.mrf.mxu0
      %v563 = vadd.f32 %v512, %v562
      %v564 = vpop.f32.mrf.mxu0
      %565 = vdwg.mxu0
      %v566 = vpack.c.bf16 %v436, %v436
      %v567 = vpack.c.bf16 %v439, %v439
      %v568 = vpack.c.bf16 %v498, %v498
      %v569 = vpack.c.bf16 %v501, %v501
      %v570 = vpack.c.bf16 %v560, %v560
      %v571 = vpack.c.bf16 %v563, %v563
      %vm572 = vcmask 64512
      %v574 = vsel %vm572, %v566, 0
      %v577 = vsel %vm572, %v568, 0
      %579 = vmatprep.subr.bf16.mxu0 0
      %580 = vmatpush1.bf16.xpose.msra.mxu0 0
      %581 = vmatprep.subr.bf16.mxu0 0
      %582 = vmatpush1.bf16.xpose.msra.mxu0 0
      %583 = vmatprep.subr.bf16.mxu0 0
      %584 = vmatpush1.bf16.xpose.msra.mxu0 0
      %585 = vmatprep.subr.bf16.mxu0 0
      %586 = vmatpush1.bf16.xpose.msra.mxu0 0
      %587 = vmatprep.subr.bf16.mxu0 0
      %588 = vmatpush1.bf16.xpose.msra.mxu0 0
      %589 = vmatprep.subr.bf16.mxu0 0
      %590 = vmatpush1.bf16.xpose.msra.mxu0 0
      %591 = vmatprep.subr.bf16.mxu0 0
      %592 = vmatpush1.bf16.xpose.msra.mxu0 0
      %593 = vmatprep.subr.bf16.mxu0 0
      %594 = vmatpush1.bf16.xpose.msra.mxu0 %v577
      %595 = vmatprep.subr.bf16.mxu0 0
      %596 = vmatpush2.bf16.xpose.msra.mxu0 0
      %597 = vmatprep.subr.bf16.mxu0 0
      %598 = vmatpush2.bf16.xpose.msra.mxu0 0
      %599 = vmatprep.subr.bf16.mxu0 0
      %600 = vmatpush2.bf16.xpose.msra.mxu0 0
      %601 = vmatprep.subr.bf16.mxu0 0
      %602 = vmatpush2.bf16.xpose.msra.mxu0 0
      %603 = vmatprep.subr.bf16.mxu0 0
      %604 = vmatpush2.bf16.xpose.msra.mxu0 0
      %605 = vmatprep.subr.bf16.mxu0 0
      %606 = vmatpush2.bf16.xpose.msra.mxu0 0
      %607 = vmatprep.subr.bf16.mxu0 0
      %608 = vmatpush2.bf16.xpose.msra.mxu0 0
      %609 = vmatprep.subr.bf16.mxu0 0
      %610 = vmatpush2.bf16.xpose.msra.mxu0 0
      %611 = vmatprep.mubr.bf16.mxu0 0
      %612 = vmatmul.mubr.bf16.gmra.mxu0 %v574
      %v613 = vpop.f32.mrf.mxu0
      %v614 = vadd.f32 %v377, %v613
      %v615 = vpop.f32.mrf.mxu0
      %v616 = vpop.f32.mrf.mxu0
      %v617 = vpop.f32.mrf.mxu0
      %618 = vdwg.mxu0
      %v620 = vsel %vm572, %v567, 0
      %v623 = vsel %vm572, %v569, 0
      %625 = vmatprep.subr.bf16.mxu0 0
      %626 = vmatpush1.bf16.xpose.msra.mxu0 0
      %627 = vmatprep.subr.bf16.mxu0 0
      %628 = vmatpush1.bf16.xpose.msra.mxu0 0
      %629 = vmatprep.subr.bf16.mxu0 0
      %630 = vmatpush1.bf16.xpose.msra.mxu0 0
      %631 = vmatprep.subr.bf16.mxu0 0
      %632 = vmatpush1.bf16.xpose.msra.mxu0 0
      %633 = vmatprep.subr.bf16.mxu0 0
      %634 = vmatpush1.bf16.xpose.msra.mxu0 0
      %635 = vmatprep.subr.bf16.mxu0 0
      %636 = vmatpush1.bf16.xpose.msra.mxu0 0
      %637 = vmatprep.subr.bf16.mxu0 0
      %638 = vmatpush1.bf16.xpose.msra.mxu0 0
      %639 = vmatprep.subr.bf16.mxu0 0
      %640 = vmatpush1.bf16.xpose.msra.mxu0 %v623
      %641 = vmatprep.subr.bf16.mxu0 0
      %642 = vmatpush2.bf16.xpose.msra.mxu0 0
      %643 = vmatprep.subr.bf16.mxu0 0
      %644 = vmatpush2.bf16.xpose.msra.mxu0 0
      %645 = vmatprep.subr.bf16.mxu0 0
      %646 = vmatpush2.bf16.xpose.msra.mxu0 0
      %647 = vmatprep.subr.bf16.mxu0 0
      %648 = vmatpush2.bf16.xpose.msra.mxu0 0
      %649 = vmatprep.subr.bf16.mxu0 0
      %650 = vmatpush2.bf16.xpose.msra.mxu0 0
      %651 = vmatprep.subr.bf16.mxu0 0
      %652 = vmatpush2.bf16.xpose.msra.mxu0 0
      %653 = vmatprep.subr.bf16.mxu0 0
      %654 = vmatpush2.bf16.xpose.msra.mxu0 0
      %655 = vmatprep.subr.bf16.mxu0 0
      %656 = vmatpush2.bf16.xpose.msra.mxu0 0
      %657 = vmatprep.mubr.bf16.mxu0 0
      %658 = vmatmul.mubr.bf16.gmra.mxu0 %v620
      %v659 = vpop.f32.mrf.mxu0
      %v660 = vadd.f32 %v377, %v659
      %v661 = vpop.f32.mrf.mxu0
      %v662 = vpop.f32.mrf.mxu0
      %v663 = vpop.f32.mrf.mxu0
      %664 = vdwg.mxu0
      %v665 = vsel %vm572, %v614, -inf
      %666 = vmax.xlane.f32.xlu0 %v665
      %v667 = vpop.xlane.xlu0 %666
      %v668 = vsel %vm572, %v660, -inf
      %669 = vmax.xlane.f32.xlu0 %v668
      %v670 = vpop.xlane.xlu0 %669
      %v671 = vsub.f32 %v614, %v667
      %v672 = vsub.f32 %v660, %v670
      %v673 = vmul.f32 %v671, 1.442695
      %v674 = vpow.pop %v673
      %v675 = vmul.f32 %v672, 1.442695
      %v676 = vpow.pop %v675
      %v677 = vsel %vm572, %v674, 0.0
      %678 = vadd.xlane.f32.xlu0 %v677
      %v679 = vpop.xlane.xlu0 %678
      %v680 = vsel %vm572, %v676, 0.0
      %681 = vadd.xlane.f32.xlu0 %v680
      %v682 = vpop.xlane.xlu0 %681
      %v683 = vrcp.pop %v679
      %v684 = vrcp.pop %v682
      %v685 = vmul.f32 %v674, %v683
      %v686 = vmul.f32 %v676, %v684
      %v687 = vpack.c.bf16 %v685, %v685
      %v688 = vpack.c.bf16 %v686, %v686
      %v690 = vsel %vm572, %v687, 0
      %vm692 = vcmask 1043456
      %v694 = vsel %vm692, %v570, 0
      %696 = vmatprep.subr.bf16.mxu0 0
      %697 = vmatpush1.bf16.msra.mxu0 0
      %698 = vmatprep.subr.bf16.mxu0 0
      %699 = vmatpush1.bf16.msra.mxu0 0
      %700 = vmatprep.subr.bf16.mxu0 0
      %701 = vmatpush1.bf16.msra.mxu0 0
      %702 = vmatprep.subr.bf16.mxu0 0
      %703 = vmatpush1.bf16.msra.mxu0 0
      %704 = vmatprep.subr.bf16.mxu0 0
      %705 = vmatpush1.bf16.msra.mxu0 0
      %706 = vmatprep.subr.bf16.mxu0 0
      %707 = vmatpush1.bf16.msra.mxu0 0
      %708 = vmatprep.subr.bf16.mxu0 0
      %709 = vmatpush1.bf16.msra.mxu0 0
      %710 = vmatprep.subr.bf16.mxu0 0
      %711 = vmatpush1.bf16.msra.mxu0 %v694
      %712 = vmatprep.subr.bf16.mxu0 0
      %713 = vmatpush2.bf16.msra.mxu0 0
      %714 = vmatprep.subr.bf16.mxu0 0
      %715 = vmatpush2.bf16.msra.mxu0 0
      %716 = vmatprep.subr.bf16.mxu0 0
      %717 = vmatpush2.bf16.msra.mxu0 0
      %718 = vmatprep.subr.bf16.mxu0 0
      %719 = vmatpush2.bf16.msra.mxu0 0
      %720 = vmatprep.subr.bf16.mxu0 0
      %721 = vmatpush2.bf16.msra.mxu0 0
      %722 = vmatprep.subr.bf16.mxu0 0
      %723 = vmatpush2.bf16.msra.mxu0 0
      %724 = vmatprep.subr.bf16.mxu0 0
      %725 = vmatpush2.bf16.msra.mxu0 0
      %726 = vmatprep.subr.bf16.mxu0 0
      %727 = vmatpush2.bf16.msra.mxu0 0
      %728 = vmatprep.mubr.bf16.mxu0 0
      %729 = vmatmul.mubr.bf16.gmra.mxu0 %v690
      %v730 = vpop.f32.mrf.mxu0
      %v731 = vadd.f32 0.0, %v730
      %v732 = vpop.f32.mrf.mxu0
      %v733 = vpop.f32.mrf.mxu0
      %v734 = vpop.f32.mrf.mxu0
      %735 = vdwg.mxu0
      %v737 = vsel %vm572, %v688, 0
      %v740 = vsel %vm692, %v571, 0
      %742 = vmatprep.subr.bf16.mxu0 0
      %743 = vmatpush1.bf16.msra.mxu0 0
      %744 = vmatprep.subr.bf16.mxu0 0
      %745 = vmatpush1.bf16.msra.mxu0 0
      %746 = vmatprep.subr.bf16.mxu0 0
      %747 = vmatpush1.bf16.msra.mxu0 0
      %748 = vmatprep.subr.bf16.mxu0 0
      %749 = vmatpush1.bf16.msra.mxu0 0
      %750 = vmatprep.subr.bf16.mxu0 0
      %751 = vmatpush1.bf16.msra.mxu0 0
      %752 = vmatprep.subr.bf16.mxu0 0
      %753 = vmatpush1.bf16.msra.mxu0 0
      %754 = vmatprep.subr.bf16.mxu0 0
      %755 = vmatpush1.bf16.msra.mxu0 0
      %756 = vmatprep.subr.bf16.mxu0 0
      %757 = vmatpush1.bf16.msra.mxu0 %v740
      %758 = vmatprep.subr.bf16.mxu0 0
      %759 = vmatpush2.bf16.msra.mxu0 0
      %760 = vmatprep.subr.bf16.mxu0 0
      %761 = vmatpush2.bf16.msra.mxu0 0
      %762 = vmatprep.subr.bf16.mxu0 0
      %763 = vmatpush2.bf16.msra.mxu0 0
      %764 = vmatprep.subr.bf16.mxu0 0
      %765 = vmatpush2.bf16.msra.mxu0 0
      %766 = vmatprep.subr.bf16.mxu0 0
      %767 = vmatpush2.bf16.msra.mxu0 0
      %768 = vmatprep.subr.bf16.mxu0 0
      %769 = vmatpush2.bf16.msra.mxu0 0
      %770 = vmatprep.subr.bf16.mxu0 0
      %771 = vmatpush2.bf16.msra.mxu0 0
      %772 = vmatprep.subr.bf16.mxu0 0
      %773 = vmatpush2.bf16.msra.mxu0 0
      %774 = vmatprep.mubr.bf16.mxu0 0
      %775 = vmatmul.mubr.bf16.gmra.mxu0 %v737
      %v776 = vpop.f32.mrf.mxu0
      %v777 = vadd.f32 0.0, %v776
      %v778 = vpop.f32.mrf.mxu0
      %v779 = vpop.f32.mrf.mxu0
      %v780 = vpop.f32.mrf.mxu0
      %781 = vdwg.mxu0
      %v782 = vpack.c.bf16 %v777, %v731
      %v783 = vld [vmem:[%s306] sm:$0xf]
      %s784 = scalar_lea.vmem %s301, 16
      %v785 = vld [vmem:[%s784] sm:$0xf]
      %v786 = vld [vmem:[%s784 + $0x4] sm:$0xf]
      %v787 = vld [vmem:[%s784 + $0x8] sm:$0xf]
      %v788 = vld [vmem:[%s784 + $0xc] sm:$0xf]
      %v793 = vunpack.c.l.b16 %v785
      %v794 = vunpack.c.l.b16 %v786
      %v795 = vunpack.c.l.b16 %v787
      %v796 = vunpack.c.l.b16 %v788
      %v797 = vpack.c.b16 %v794, %v793
      %v798 = vpack.c.b16 %v796, %v795
      %802 = vrot.lane.b32.xlu0 %v385, 120
      %v803 = vpop.permute.xlu0 %802
      %805 = vmatprep.subr.bf16.mxu0 0
      %806 = vmatpush1.bf16.msra.mxu0 0
      %807 = vmatprep.subr.bf16.mxu0 0
      %808 = vmatpush1.bf16.msra.mxu0 0
      %809 = vmatprep.subr.bf16.mxu0 0
      %810 = vmatpush1.bf16.msra.mxu0 0
      %811 = vmatprep.subr.bf16.mxu0 0
      %812 = vmatpush1.bf16.msra.mxu0 0
      %813 = vmatprep.subr.bf16.mxu0 0
      %814 = vmatpush1.bf16.msra.mxu0 0
      %815 = vmatprep.subr.bf16.mxu0 0
      %816 = vmatpush1.bf16.msra.mxu0 0
      %817 = vmatprep.subr.bf16.mxu0 0
      %818 = vmatpush1.bf16.msra.mxu0 %v798
      %819 = vmatprep.subr.bf16.mxu0 0
      %820 = vmatpush1.bf16.msra.mxu0 %v797
      %821 = vmatprep.subr.bf16.mxu0 0
      %822 = vmatpush2.bf16.msra.mxu0 0
      %823 = vmatprep.subr.bf16.mxu0 0
      %824 = vmatpush2.bf16.msra.mxu0 0
      %825 = vmatprep.subr.bf16.mxu0 0
      %826 = vmatpush2.bf16.msra.mxu0 0
      %827 = vmatprep.subr.bf16.mxu0 0
      %828 = vmatpush2.bf16.msra.mxu0 0
      %829 = vmatprep.subr.bf16.mxu0 0
      %830 = vmatpush2.bf16.msra.mxu0 0
      %831 = vmatprep.subr.bf16.mxu0 0
      %832 = vmatpush2.bf16.msra.mxu0 0
      %833 = vmatprep.subr.bf16.mxu0 0
      %834 = vmatpush2.bf16.msra.mxu0 0
      %835 = vmatprep.subr.bf16.mxu0 0
      %836 = vmatpush2.bf16.msra.mxu0 0
      %837 = vmatprep.mubr.bf16.mxu0 0
      %838 = vmatmul.mubr.bf16.gmra.mxu0 %v399
      %v839 = vpop.f32.mrf.mxu0
      %v840 = vadd.f32 %v803, %v839
      %v841 = vpop.f32.mrf.mxu0
      %v842 = vpop.f32.mrf.mxu0
      %v843 = vadd.f32 %v803, %v842
      %v844 = vpop.f32.mrf.mxu0
      %845 = vdwg.mxu0
      %s846 = scalar_lea.vmem %s301, 80
      %v847 = vld [vmem:[%s846] sm:$0xf]
      %v848 = vld [vmem:[%s846 + $0x4] sm:$0xf]
      %v849 = vld [vmem:[%s846 + $0x8] sm:$0xf]
      %v850 = vld [vmem:[%s846 + $0xc] sm:$0xf]
      %v855 = vunpack.c.l.b16 %v847
      %v856 = vunpack.c.l.b16 %v848
      %v857 = vunpack.c.l.b16 %v849
      %v858 = vunpack.c.l.b16 %v850
      %v859 = vpack.c.b16 %v856, %v855
      %v860 = vpack.c.b16 %v858, %v857
      %864 = vrot.lane.b32.xlu0 %v450, 120
      %v865 = vpop.permute.xlu0 %864
      %867 = vmatprep.subr.bf16.mxu0 0
      %868 = vmatpush1.bf16.msra.mxu0 0
      %869 = vmatprep.subr.bf16.mxu0 0
      %870 = vmatpush1.bf16.msra.mxu0 0
      %871 = vmatprep.subr.bf16.mxu0 0
      %872 = vmatpush1.bf16.msra.mxu0 0
      %873 = vmatprep.subr.bf16.mxu0 0
      %874 = vmatpush1.bf16.msra.mxu0 0
      %875 = vmatprep.subr.bf16.mxu0 0
      %876 = vmatpush1.bf16.msra.mxu0 0
      %877 = vmatprep.subr.bf16.mxu0 0
      %878 = vmatpush1.bf16.msra.mxu0 0
      %879 = vmatprep.subr.bf16.mxu0 0
      %880 = vmatpush1.bf16.msra.mxu0 %v860
      %881 = vmatprep.subr.bf16.mxu0 0
      %882 = vmatpush1.bf16.msra.mxu0 %v859
      %883 = vmatprep.subr.bf16.mxu0 0
      %884 = vmatpush2.bf16.msra.mxu0 0
      %885 = vmatprep.subr.bf16.mxu0 0
      %886 = vmatpush2.bf16.msra.mxu0 0
      %887 = vmatprep.subr.bf16.mxu0 0
      %888 = vmatpush2.bf16.msra.mxu0 0
      %889 = vmatprep.subr.bf16.mxu0 0
      %890 = vmatpush2.bf16.msra.mxu0 0
      %891 = vmatprep.subr.bf16.mxu0 0
      %892 = vmatpush2.bf16.msra.mxu0 0
      %893 = vmatprep.subr.bf16.mxu0 0
      %894 = vmatpush2.bf16.msra.mxu0 0
      %895 = vmatprep.subr.bf16.mxu0 0
      %896 = vmatpush2.bf16.msra.mxu0 0
      %897 = vmatprep.subr.bf16.mxu0 0
      %898 = vmatpush2.bf16.msra.mxu0 0
      %899 = vmatprep.mubr.bf16.mxu0 0
      %900 = vmatmul.mubr.bf16.gmra.mxu0 %v399
      %v901 = vpop.f32.mrf.mxu0
      %v902 = vadd.f32 %v865, %v901
      %v903 = vpop.f32.mrf.mxu0
      %v904 = vpop.f32.mrf.mxu0
      %v905 = vadd.f32 %v865, %v904
      %v906 = vpop.f32.mrf.mxu0
      %907 = vdwg.mxu0
      %s908 = scalar_lea.vmem %s301, 144
      %v909 = vld [vmem:[%s908] sm:$0xf]
      %v910 = vld [vmem:[%s908 + $0x4] sm:$0xf]
      %v911 = vld [vmem:[%s908 + $0x8] sm:$0xf]
      %v912 = vld [vmem:[%s908 + $0xc] sm:$0xf]
      %v917 = vunpack.c.l.b16 %v909
      %v918 = vunpack.c.l.b16 %v910
      %v919 = vunpack.c.l.b16 %v911
      %v920 = vunpack.c.l.b16 %v912
      %v921 = vpack.c.b16 %v918, %v917
      %v922 = vpack.c.b16 %v920, %v919
      %926 = vrot.lane.b32.xlu0 %v512, 120
      %v927 = vpop.permute.xlu0 %926
      %929 = vmatprep.subr.bf16.mxu0 0
      %930 = vmatpush1.bf16.msra.mxu0 0
      %931 = vmatprep.subr.bf16.mxu0 0
      %932 = vmatpush1.bf16.msra.mxu0 0
      %933 = vmatprep.subr.bf16.mxu0 0
      %934 = vmatpush1.bf16.msra.mxu0 0
      %935 = vmatprep.subr.bf16.mxu0 0
      %936 = vmatpush1.bf16.msra.mxu0 0
      %937 = vmatprep.subr.bf16.mxu0 0
      %938 = vmatpush1.bf16.msra.mxu0 0
      %939 = vmatprep.subr.bf16.mxu0 0
      %940 = vmatpush1.bf16.msra.mxu0 0
      %941 = vmatprep.subr.bf16.mxu0 0
      %942 = vmatpush1.bf16.msra.mxu0 %v922
      %943 = vmatprep.subr.bf16.mxu0 0
      %944 = vmatpush1.bf16.msra.mxu0 %v921
      %945 = vmatprep.subr.bf16.mxu0 0
      %946 = vmatpush2.bf16.msra.mxu0 0
      %947 = vmatprep.subr.bf16.mxu0 0
      %948 = vmatpush2.bf16.msra.mxu0 0
      %949 = vmatprep.subr.bf16.mxu0 0
      %950 = vmatpush2.bf16.msra.mxu0 0
      %951 = vmatprep.subr.bf16.mxu0 0
      %952 = vmatpush2.bf16.msra.mxu0 0
      %953 = vmatprep.subr.bf16.mxu0 0
      %954 = vmatpush2.bf16.msra.mxu0 0
      %955 = vmatprep.subr.bf16.mxu0 0
      %956 = vmatpush2.bf16.msra.mxu0 0
      %957 = vmatprep.subr.bf16.mxu0 0
      %958 = vmatpush2.bf16.msra.mxu0 0
      %959 = vmatprep.subr.bf16.mxu0 0
      %960 = vmatpush2.bf16.msra.mxu0 0
      %961 = vmatprep.mubr.bf16.mxu0 0
      %962 = vmatmul.mubr.bf16.gmra.mxu0 %v399
      %v963 = vpop.f32.mrf.mxu0
      %v964 = vadd.f32 %v927, %v963
      %v965 = vpop.f32.mrf.mxu0
      %v966 = vpop.f32.mrf.mxu0
      %v967 = vadd.f32 %v927, %v966
      %v968 = vpop.f32.mrf.mxu0
      %969 = vdwg.mxu0
      %v970 = vpack.c.bf16 %v840, %v840
      %v971 = vpack.c.bf16 %v843, %v843
      %v972 = vpack.c.bf16 %v902, %v902
      %v973 = vpack.c.bf16 %v905, %v905
      %v974 = vpack.c.bf16 %v964, %v964
      %v975 = vpack.c.bf16 %v967, %v967
      %v977 = vsel %vm572, %v970, 0
      %v980 = vsel %vm572, %v972, 0
      %982 = vmatprep.subr.bf16.mxu0 0
      %983 = vmatpush1.bf16.xpose.msra.mxu0 0
      %984 = vmatprep.subr.bf16.mxu0 0
      %985 = vmatpush1.bf16.xpose.msra.mxu0 0
      %986 = vmatprep.subr.bf16.mxu0 0
      %987 = vmatpush1.bf16.xpose.msra.mxu0 0
      %988 = vmatprep.subr.bf16.mxu0 0
      %989 = vmatpush1.bf16.xpose.msra.mxu0 0
      %990 = vmatprep.subr.bf16.mxu0 0
      %991 = vmatpush1.bf16.xpose.msra.mxu0 0
      %992 = vmatprep.subr.bf16.mxu0 0
      %993 = vmatpush1.bf16.xpose.msra.mxu0 0
      %994 = vmatprep.subr.bf16.mxu0 0
      %995 = vmatpush1.bf16.xpose.msra.mxu0 0
      %996 = vmatprep.subr.bf16.mxu0 0
      %997 = vmatpush1.bf16.xpose.msra.mxu0 %v980
      %998 = vmatprep.subr.bf16.mxu0 0
      %999 = vmatpush2.bf16.xpose.msra.mxu0 0
      %1000 = vmatprep.subr.bf16.mxu0 0
      %1001 = vmatpush2.bf16.xpose.msra.mxu0 0
      %1002 = vmatprep.subr.bf16.mxu0 0
      %1003 = vmatpush2.bf16.xpose.msra.mxu0 0
      %1004 = vmatprep.subr.bf16.mxu0 0
      %1005 = vmatpush2.bf16.xpose.msra.mxu0 0
      %1006 = vmatprep.subr.bf16.mxu0 0
      %1007 = vmatpush2.bf16.xpose.msra.mxu0 0
      %1008 = vmatprep.subr.bf16.mxu0 0
      %1009 = vmatpush2.bf16.xpose.msra.mxu0 0
      %1010 = vmatprep.subr.bf16.mxu0 0
      %1011 = vmatpush2.bf16.xpose.msra.mxu0 0
      %1012 = vmatprep.subr.bf16.mxu0 0
      %1013 = vmatpush2.bf16.xpose.msra.mxu0 0
      %1014 = vmatprep.mubr.bf16.mxu0 0
      %1015 = vmatmul.mubr.bf16.gmra.mxu0 %v977
      %v1016 = vpop.f32.mrf.mxu0
      %v1017 = vadd.f32 %v377, %v1016
      %v1018 = vpop.f32.mrf.mxu0
      %v1019 = vpop.f32.mrf.mxu0
      %v1020 = vpop.f32.mrf.mxu0
      %1021 = vdwg.mxu0
      %v1023 = vsel %vm572, %v971, 0
      %v1026 = vsel %vm572, %v973, 0
      %1028 = vmatprep.subr.bf16.mxu0 0
      %1029 = vmatpush1.bf16.xpose.msra.mxu0 0
      %1030 = vmatprep.subr.bf16.mxu0 0
      %1031 = vmatpush1.bf16.xpose.msra.mxu0 0
      %1032 = vmatprep.subr.bf16.mxu0 0
      %1033 = vmatpush1.bf16.xpose.msra.mxu0 0
      %1034 = vmatprep.subr.bf16.mxu0 0
      %1035 = vmatpush1.bf16.xpose.msra.mxu0 0
      %1036 = vmatprep.subr.bf16.mxu0 0
      %1037 = vmatpush1.bf16.xpose.msra.mxu0 0
      %1038 = vmatprep.subr.bf16.mxu0 0
      %1039 = vmatpush1.bf16.xpose.msra.mxu0 0
      %1040 = vmatprep.subr.bf16.mxu0 0
      %1041 = vmatpush1.bf16.xpose.msra.mxu0 0
      %1042 = vmatprep.subr.bf16.mxu0 0
      %1043 = vmatpush1.bf16.xpose.msra.mxu0 %v1026
      %1044 = vmatprep.subr.bf16.mxu0 0
      %1045 = vmatpush2.bf16.xpose.msra.mxu0 0
      %1046 = vmatprep.subr.bf16.mxu0 0
      %1047 = vmatpush2.bf16.xpose.msra.mxu0 0
      %1048 = vmatprep.subr.bf16.mxu0 0
      %1049 = vmatpush2.bf16.xpose.msra.mxu0 0
      %1050 = vmatprep.subr.bf16.mxu0 0
      %1051 = vmatpush2.bf16.xpose.msra.mxu0 0
      %1052 = vmatprep.subr.bf16.mxu0 0
      %1053 = vmatpush2.bf16.xpose.msra.mxu0 0
      %1054 = vmatprep.subr.bf16.mxu0 0
      %1055 = vmatpush2.bf16.xpose.msra.mxu0 0
      %1056 = vmatprep.subr.bf16.mxu0 0
      %1057 = vmatpush2.bf16.xpose.msra.mxu0 0
      %1058 = vmatprep.subr.bf16.mxu0 0
      %1059 = vmatpush2.bf16.xpose.msra.mxu0 0
      %1060 = vmatprep.mubr.bf16.mxu0 0
      %1061 = vmatmul.mubr.bf16.gmra.mxu0 %v1023
      %v1062 = vpop.f32.mrf.mxu0
      %v1063 = vadd.f32 %v377, %v1062
      %v1064 = vpop.f32.mrf.mxu0
      %v1065 = vpop.f32.mrf.mxu0
      %v1066 = vpop.f32.mrf.mxu0
      %1067 = vdwg.mxu0
      %v1068 = vsel %vm572, %v1017, -inf
      %1069 = vmax.xlane.f32.xlu0 %v1068
      %v1070 = vpop.xlane.xlu0 %1069
      %v1071 = vsel %vm572, %v1063, -inf
      %1072 = vmax.xlane.f32.xlu0 %v1071
      %v1073 = vpop.xlane.xlu0 %1072
      %v1074 = vsub.f32 %v1017, %v1070
      %v1075 = vsub.f32 %v1063, %v1073
      %v1076 = vmul.f32 %v1074, 1.442695
      %v1077 = vpow.pop %v1076
      %v1078 = vmul.f32 %v1075, 1.442695
      %v1079 = vpow.pop %v1078
      %v1080 = vsel %vm572, %v1077, 0.0
      %1081 = vadd.xlane.f32.xlu0 %v1080
      %v1082 = vpop.xlane.xlu0 %1081
      %v1083 = vsel %vm572, %v1079, 0.0
      %1084 = vadd.xlane.f32.xlu0 %v1083
      %v1085 = vpop.xlane.xlu0 %1084
      %v1086 = vrcp.pop %v1082
      %v1087 = vrcp.pop %v1085
      %v1088 = vmul.f32 %v1077, %v1086
      %v1089 = vmul.f32 %v1079, %v1087
      %v1090 = vpack.c.bf16 %v1088, %v1088
      %v1091 = vpack.c.bf16 %v1089, %v1089
      %v1093 = vsel %vm572, %v1090, 0
      %v1096 = vsel %vm692, %v974, 0
      %1098 = vmatprep.subr.bf16.mxu0 0
      %1099 = vmatpush1.bf16.msra.mxu0 0
      %1100 = vmatprep.subr.bf16.mxu0 0
      %1101 = vmatpush1.bf16.msra.mxu0 0
      %1102 = vmatprep.subr.bf16.mxu0 0
      %1103 = vmatpush1.bf16.msra.mxu0 0
      %1104 = vmatprep.subr.bf16.mxu0 0
      %1105 = vmatpush1.bf16.msra.mxu0 0
      %1106 = vmatprep.subr.bf16.mxu0 0
      %1107 = vmatpush1.bf16.msra.mxu0 0
      %1108 = vmatprep.subr.bf16.mxu0 0
      %1109 = vmatpush1.bf16.msra.mxu0 0
      %1110 = vmatprep.subr.bf16.mxu0 0
      %1111 = vmatpush1.bf16.msra.mxu0 0
      %1112 = vmatprep.subr.bf16.mxu0 0
      %1113 = vmatpush1.bf16.msra.mxu0 %v1096
      %1114 = vmatprep.subr.bf16.mxu0 0
      %1115 = vmatpush2.bf16.msra.mxu0 0
      %1116 = vmatprep.subr.bf16.mxu0 0
      %1117 = vmatpush2.bf16.msra.mxu0 0
      %1118 = vmatprep.subr.bf16.mxu0 0
      %1119 = vmatpush2.bf16.msra.mxu0 0
      %1120 = vmatprep.subr.bf16.mxu0 0
      %1121 = vmatpush2.bf16.msra.mxu0 0
      %1122 = vmatprep.subr.bf16.mxu0 0
      %1123 = vmatpush2.bf16.msra.mxu0 0
      %1124 = vmatprep.subr.bf16.mxu0 0
      %1125 = vmatpush2.bf16.msra.mxu0 0
      %1126 = vmatprep.subr.bf16.mxu0 0
      %1127 = vmatpush2.bf16.msra.mxu0 0
      %1128 = vmatprep.subr.bf16.mxu0 0
      %1129 = vmatpush2.bf16.msra.mxu0 0
      %1130 = vmatprep.mubr.bf16.mxu0 0
      %1131 = vmatmul.mubr.bf16.gmra.mxu0 %v1093
      %v1132 = vpop.f32.mrf.mxu0
      %v1133 = vadd.f32 0.0, %v1132
      %v1134 = vpop.f32.mrf.mxu0
      %v1135 = vpop.f32.mrf.mxu0
      %v1136 = vpop.f32.mrf.mxu0
      %1137 = vdwg.mxu0
      %v1139 = vsel %vm572, %v1091, 0
      %v1142 = vsel %vm692, %v975, 0
      %1144 = vmatprep.subr.bf16.mxu0 0
      %1145 = vmatpush1.bf16.msra.mxu0 0
      %1146 = vmatprep.subr.bf16.mxu0 0
      %1147 = vmatpush1.bf16.msra.mxu0 0
      %1148 = vmatprep.subr.bf16.mxu0 0
      %1149 = vmatpush1.bf16.msra.mxu0 0
      %1150 = vmatprep.subr.bf16.mxu0 0
      %1151 = vmatpush1.bf16.msra.mxu0 0
      %1152 = vmatprep.subr.bf16.mxu0 0
      %1153 = vmatpush1.bf16.msra.mxu0 0
      %1154 = vmatprep.subr.bf16.mxu0 0
      %1155 = vmatpush1.bf16.msra.mxu0 0
      %1156 = vmatprep.subr.bf16.mxu0 0
      %1157 = vmatpush1.bf16.msra.mxu0 0
      %1158 = vmatprep.subr.bf16.mxu0 0
      %1159 = vmatpush1.bf16.msra.mxu0 %v1142
      %1160 = vmatprep.subr.bf16.mxu0 0
      %1161 = vmatpush2.bf16.msra.mxu0 0
      %1162 = vmatprep.subr.bf16.mxu0 0
      %1163 = vmatpush2.bf16.msra.mxu0 0
      %1164 = vmatprep.subr.bf16.mxu0 0
      %1165 = vmatpush2.bf16.msra.mxu0 0
      %1166 = vmatprep.subr.bf16.mxu0 0
      %1167 = vmatpush2.bf16.msra.mxu0 0
      %1168 = vmatprep.subr.bf16.mxu0 0
      %1169 = vmatpush2.bf16.msra.mxu0 0
      %1170 = vmatprep.subr.bf16.mxu0 0
      %1171 = vmatpush2.bf16.msra.mxu0 0
      %1172 = vmatprep.subr.bf16.mxu0 0
      %1173 = vmatpush2.bf16.msra.mxu0 0
      %1174 = vmatprep.subr.bf16.mxu0 0
      %1175 = vmatpush2.bf16.msra.mxu0 0
      %1176 = vmatprep.mubr.bf16.mxu0 0
      %1177 = vmatmul.mubr.bf16.gmra.mxu0 %v1139
      %v1178 = vpop.f32.mrf.mxu0
      %v1179 = vadd.f32 0.0, %v1178
      %v1180 = vpop.f32.mrf.mxu0
      %v1181 = vpop.f32.mrf.mxu0
      %v1182 = vpop.f32.mrf.mxu0
      %1183 = vdwg.mxu0
      %v1184 = vpack.c.bf16 %v1179, %v1133
      %s1185 = scalar_lea.vmem %s306, 4
      %v1186 = vld [vmem:[%s1185] sm:$0xf]
      %v1188 = vsel %vm572, %v1184, 0
      %v1191 = vsel %vm692, %v1186, 0
      %1193 = vmatprep.subr.bf16.mxu0 0
      %1194 = vmatpush1.bf16.msra.mxu0 0
      %1195 = vmatprep.subr.bf16.mxu0 0
      %1196 = vmatpush1.bf16.msra.mxu0 0
      %1197 = vmatprep.subr.bf16.mxu0 0
      %1198 = vmatpush1.bf16.msra.mxu0 0
      %1199 = vmatprep.subr.bf16.mxu0 0
      %1200 = vmatpush1.bf16.msra.mxu0 0
      %1201 = vmatprep.subr.bf16.mxu0 0
      %1202 = vmatpush1.bf16.msra.mxu0 0
      %1203 = vmatprep.subr.bf16.mxu0 0
      %1204 = vmatpush1.bf16.msra.mxu0 0
      %1205 = vmatprep.subr.bf16.mxu0 0
      %1206 = vmatpush1.bf16.msra.mxu0 0
      %1207 = vmatprep.subr.bf16.mxu0 0
      %1208 = vmatpush1.bf16.msra.mxu0 %v1191
      %1209 = vmatprep.subr.bf16.mxu0 0
      %1210 = vmatpush2.bf16.msra.mxu0 0
      %1211 = vmatprep.subr.bf16.mxu0 0
      %1212 = vmatpush2.bf16.msra.mxu0 0
      %1213 = vmatprep.subr.bf16.mxu0 0
      %1214 = vmatpush2.bf16.msra.mxu0 0
      %1215 = vmatprep.subr.bf16.mxu0 0
      %1216 = vmatpush2.bf16.msra.mxu0 0
      %1217 = vmatprep.subr.bf16.mxu0 0
      %1218 = vmatpush2.bf16.msra.mxu0 0
      %1219 = vmatprep.subr.bf16.mxu0 0
      %1220 = vmatpush2.bf16.msra.mxu0 0
      %1221 = vmatprep.subr.bf16.mxu0 0
      %1222 = vmatpush2.bf16.msra.mxu0 0
      %1223 = vmatprep.subr.bf16.mxu0 0
      %1224 = vmatpush2.bf16.msra.mxu0 0
      %1225 = vmatprep.mubr.bf16.mxu0 0
      %1226 = vmatmul.mubr.bf16.gmra.mxu0 %v1188
      %v1227 = vpop.f32.mrf.mxu0
      %v1228 = vadd.f32 0.0, %v1227
      %v1229 = vpop.f32.mrf.mxu0
      %v1230 = vpop.f32.mrf.mxu0
      %v1231 = vadd.f32 0.0, %v1230
      %v1232 = vpop.f32.mrf.mxu0
      %1233 = vdwg.mxu0
      %v1235 = vsel %vm572, %v782, 0
      %v1238 = vsel %vm692, %v783, 0
      %1240 = vmatprep.subr.bf16.mxu0 0
      %1241 = vmatpush1.bf16.msra.mxu0 0
      %1242 = vmatprep.subr.bf16.mxu0 0
      %1243 = vmatpush1.bf16.msra.mxu0 0
      %1244 = vmatprep.subr.bf16.mxu0 0
      %1245 = vmatpush1.bf16.msra.mxu0 0
      %1246 = vmatprep.subr.bf16.mxu0 0
      %1247 = vmatpush1.bf16.msra.mxu0 0
      %1248 = vmatprep.subr.bf16.mxu0 0
      %1249 = vmatpush1.bf16.msra.mxu0 0
      %1250 = vmatprep.subr.bf16.mxu0 0
      %1251 = vmatpush1.bf16.msra.mxu0 0
      %1252 = vmatprep.subr.bf16.mxu0 0
      %1253 = vmatpush1.bf16.msra.mxu0 0
      %1254 = vmatprep.subr.bf16.mxu0 0
      %1255 = vmatpush1.bf16.msra.mxu0 %v1238
      %1256 = vmatprep.subr.bf16.mxu0 0
      %1257 = vmatpush2.bf16.msra.mxu0 0
      %1258 = vmatprep.subr.bf16.mxu0 0
      %1259 = vmatpush2.bf16.msra.mxu0 0
      %1260 = vmatprep.subr.bf16.mxu0 0
      %1261 = vmatpush2.bf16.msra.mxu0 0
      %1262 = vmatprep.subr.bf16.mxu0 0
      %1263 = vmatpush2.bf16.msra.mxu0 0
      %1264 = vmatprep.subr.bf16.mxu0 0
      %1265 = vmatpush2.bf16.msra.mxu0 0
      %1266 = vmatprep.subr.bf16.mxu0 0
      %1267 = vmatpush2.bf16.msra.mxu0 0
      %1268 = vmatprep.subr.bf16.mxu0 0
      %1269 = vmatpush2.bf16.msra.mxu0 0
      %1270 = vmatprep.subr.bf16.mxu0 0
      %1271 = vmatpush2.bf16.msra.mxu0 0
      %1272 = vmatprep.mubr.bf16.mxu0 0
      %1273 = vmatmul.mubr.bf16.gmra.mxu0 %v1235
      %v1274 = vpop.f32.mrf.mxu0
      %v1275 = vadd.f32 %v1228, %v1274
      %v1276 = vpop.f32.mrf.mxu0
      %v1277 = vpop.f32.mrf.mxu0
      %v1278 = vadd.f32 %v1231, %v1277
      %v1279 = vpop.f32.mrf.mxu0
      %1280 = vdwg.mxu0
      %s1281 = scalar_lea.vmem %s301, 32
      %v1282 = vld [vmem:[%s1281] sm:$0xf]
      %v1283 = vld [vmem:[%s1281 + $0x4] sm:$0xf]
      %v1284 = vld [vmem:[%s1281 + $0x8] sm:$0xf]
      %v1285 = vld [vmem:[%s1281 + $0xc] sm:$0xf]
      %v1290 = vunpack.c.l.b16 %v1282
      %v1291 = vunpack.c.l.b16 %v1283
      %v1292 = vunpack.c.l.b16 %v1284
      %v1293 = vunpack.c.l.b16 %v1285
      %v1294 = vpack.c.b16 %v1291, %v1290
      %v1295 = vpack.c.b16 %v1293, %v1292
      %1298 = vrot.lane.b32.xlu0 %v385, 112
      %v1299 = vpop.permute.xlu0 %1298
      %1301 = vmatprep.subr.bf16.mxu0 0
      %1302 = vmatpush1.bf16.msra.mxu0 0
      %1303 = vmatprep.subr.bf16.mxu0 0
      %1304 = vmatpush1.bf16.msra.mxu0 0
      %1305 = vmatprep.subr.bf16.mxu0 0
      %1306 = vmatpush1.bf16.msra.mxu0 0
      %1307 = vmatprep.subr.bf16.mxu0 0
      %1308 = vmatpush1.bf16.msra.mxu0 0
      %1309 = vmatprep.subr.bf16.mxu0 0
      %1310 = vmatpush1.bf16.msra.mxu0 0
      %1311 = vmatprep.subr.bf16.mxu0 0
      %1312 = vmatpush1.bf16.msra.mxu0 0
      %1313 = vmatprep.subr.bf16.mxu0 0
      %1314 = vmatpush1.bf16.msra.mxu0 %v1295
      %1315 = vmatprep.subr.bf16.mxu0 0
      %1316 = vmatpush1.bf16.msra.mxu0 %v1294
      %1317 = vmatprep.subr.bf16.mxu0 0
      %1318 = vmatpush2.bf16.msra.mxu0 0
      %1319 = vmatprep.subr.bf16.mxu0 0
      %1320 = vmatpush2.bf16.msra.mxu0 0
      %1321 = vmatprep.subr.bf16.mxu0 0
      %1322 = vmatpush2.bf16.msra.mxu0 0
      %1323 = vmatprep.subr.bf16.mxu0 0
      %1324 = vmatpush2.bf16.msra.mxu0 0
      %1325 = vmatprep.subr.bf16.mxu0 0
      %1326 = vmatpush2.bf16.msra.mxu0 0
      %1327 = vmatprep.subr.bf16.mxu0 0
      %1328 = vmatpush2.bf16.msra.mxu0 0
      %1329 = vmatprep.subr.bf16.mxu0 0
      %1330 = vmatpush2.bf16.msra.mxu0 0
      %1331 = vmatprep.subr.bf16.mxu0 0
      %1332 = vmatpush2.bf16.msra.mxu0 0
      %1333 = vmatprep.mubr.bf16.mxu0 0
      %1334 = vmatmul.mubr.bf16.gmra.mxu0 %v399
      %v1335 = vpop.f32.mrf.mxu0
      %v1336 = vadd.f32 %v1299, %v1335
      %v1337 = vpop.f32.mrf.mxu0
      %v1338 = vpop.f32.mrf.mxu0
      %v1339 = vadd.f32 %v1299, %v1338
      %v1340 = vpop.f32.mrf.mxu0
      %1341 = vdwg.mxu0
      %s1342 = scalar_lea.vmem %s301, 96
      %v1343 = vld [vmem:[%s1342] sm:$0xf]
      %v1344 = vld [vmem:[%s1342 + $0x4] sm:$0xf]
      %v1345 = vld [vmem:[%s1342 + $0x8] sm:$0xf]
      %v1346 = vld [vmem:[%s1342 + $0xc] sm:$0xf]
      %v1351 = vunpack.c.l.b16 %v1343
      %v1352 = vunpack.c.l.b16 %v1344
      %v1353 = vunpack.c.l.b16 %v1345
      %v1354 = vunpack.c.l.b16 %v1346
      %v1355 = vpack.c.b16 %v1352, %v1351
      %v1356 = vpack.c.b16 %v1354, %v1353
      %1359 = vrot.lane.b32.xlu0 %v450, 112
      %v1360 = vpop.permute.xlu0 %1359
      %1362 = vmatprep.subr.bf16.mxu0 0
      %1363 = vmatpush1.bf16.msra.mxu0 0
      %1364 = vmatprep.subr.bf16.mxu0 0
      %1365 = vmatpush1.bf16.msra.mxu0 0
      %1366 = vmatprep.subr.bf16.mxu0 0
      %1367 = vmatpush1.bf16.msra.mxu0 0
      %1368 = vmatprep.subr.bf16.mxu0 0
      %1369 = vmatpush1.bf16.msra.mxu0 0
      %1370 = vmatprep.subr.bf16.mxu0 0
      %1371 = vmatpush1.bf16.msra.mxu0 0
      %1372 = vmatprep.subr.bf16.mxu0 0
      %1373 = vmatpush1.bf16.msra.mxu0 0
      %1374 = vmatprep.subr.bf16.mxu0 0
      %1375 = vmatpush1.bf16.msra.mxu0 %v1356
      %1376 = vmatprep.subr.bf16.mxu0 0
      %1377 = vmatpush1.bf16.msra.mxu0 %v1355
      %1378 = vmatprep.subr.bf16.mxu0 0
      %1379 = vmatpush2.bf16.msra.mxu0 0
      %1380 = vmatprep.subr.bf16.mxu0 0
      %1381 = vmatpush2.bf16.msra.mxu0 0
      %1382 = vmatprep.subr.bf16.mxu0 0
      %1383 = vmatpush2.bf16.msra.mxu0 0
      %1384 = vmatprep.subr.bf16.mxu0 0
      %1385 = vmatpush2.bf16.msra.mxu0 0
      %1386 = vmatprep.subr.bf16.mxu0 0
      %1387 = vmatpush2.bf16.msra.mxu0 0
      %1388 = vmatprep.subr.bf16.mxu0 0
      %1389 = vmatpush2.bf16.msra.mxu0 0
      %1390 = vmatprep.subr.bf16.mxu0 0
      %1391 = vmatpush2.bf16.msra.mxu0 0
      %1392 = vmatprep.subr.bf16.mxu0 0
      %1393 = vmatpush2.bf16.msra.mxu0 0
      %1394 = vmatprep.mubr.bf16.mxu0 0
      %1395 = vmatmul.mubr.bf16.gmra.mxu0 %v399
      %v1396 = vpop.f32.mrf.mxu0
      %v1397 = vadd.f32 %v1360, %v1396
      %v1398 = vpop.f32.mrf.mxu0
      %v1399 = vpop.f32.mrf.mxu0
      %v1400 = vadd.f32 %v1360, %v1399
      %v1401 = vpop.f32.mrf.mxu0
      %1402 = vdwg.mxu0
      %s1403 = scalar_lea.vmem %s301, 160
      %v1404 = vld [vmem:[%s1403] sm:$0xf]
      %v1405 = vld [vmem:[%s1403 + $0x4] sm:$0xf]
      %v1406 = vld [vmem:[%s1403 + $0x8] sm:$0xf]
      %v1407 = vld [vmem:[%s1403 + $0xc] sm:$0xf]
      %v1412 = vunpack.c.l.b16 %v1404
      %v1413 = vunpack.c.l.b16 %v1405
      %v1414 = vunpack.c.l.b16 %v1406
      %v1415 = vunpack.c.l.b16 %v1407
      %v1416 = vpack.c.b16 %v1413, %v1412
      %v1417 = vpack.c.b16 %v1415, %v1414
      %1420 = vrot.lane.b32.xlu0 %v512, 112
      %v1421 = vpop.permute.xlu0 %1420
      %1423 = vmatprep.subr.bf16.mxu0 0
      %1424 = vmatpush1.bf16.msra.mxu0 0
      %1425 = vmatprep.subr.bf16.mxu0 0
      %1426 = vmatpush1.bf16.msra.mxu0 0
      %1427 = vmatprep.subr.bf16.mxu0 0
      %1428 = vmatpush1.bf16.msra.mxu0 0
      %1429 = vmatprep.subr.bf16.mxu0 0
      %1430 = vmatpush1.bf16.msra.mxu0 0
      %1431 = vmatprep.subr.bf16.mxu0 0
      %1432 = vmatpush1.bf16.msra.mxu0 0
      %1433 = vmatprep.subr.bf16.mxu0 0
      %1434 = vmatpush1.bf16.msra.mxu0 0
      %1435 = vmatprep.subr.bf16.mxu0 0
      %1436 = vmatpush1.bf16.msra.mxu0 %v1417
      %1437 = vmatprep.subr.bf16.mxu0 0
      %1438 = vmatpush1.bf16.msra.mxu0 %v1416
      %1439 = vmatprep.subr.bf16.mxu0 0
      %1440 = vmatpush2.bf16.msra.mxu0 0
      %1441 = vmatprep.subr.bf16.mxu0 0
      %1442 = vmatpush2.bf16.msra.mxu0 0
      %1443 = vmatprep.subr.bf16.mxu0 0
      %1444 = vmatpush2.bf16.msra.mxu0 0
      %1445 = vmatprep.subr.bf16.mxu0 0
      %1446 = vmatpush2.bf16.msra.mxu0 0
      %1447 = vmatprep.subr.bf16.mxu0 0
      %1448 = vmatpush2.bf16.msra.mxu0 0
      %1449 = vmatprep.subr.bf16.mxu0 0
      %1450 = vmatpush2.bf16.msra.mxu0 0
      %1451 = vmatprep.subr.bf16.mxu0 0
      %1452 = vmatpush2.bf16.msra.mxu0 0
      %1453 = vmatprep.subr.bf16.mxu0 0
      %1454 = vmatpush2.bf16.msra.mxu0 0
      %1455 = vmatprep.mubr.bf16.mxu0 0
      %1456 = vmatmul.mubr.bf16.gmra.mxu0 %v399
      %v1457 = vpop.f32.mrf.mxu0
      %v1458 = vadd.f32 %v1421, %v1457
      %v1459 = vpop.f32.mrf.mxu0
      %v1460 = vpop.f32.mrf.mxu0
      %v1461 = vadd.f32 %v1421, %v1460
      %v1462 = vpop.f32.mrf.mxu0
      %1463 = vdwg.mxu0
      %v1464 = vpack.c.bf16 %v1336, %v1336
      %v1465 = vpack.c.bf16 %v1339, %v1339
      %v1466 = vpack.c.bf16 %v1397, %v1397
      %v1467 = vpack.c.bf16 %v1400, %v1400
      %v1468 = vpack.c.bf16 %v1458, %v1458
      %v1469 = vpack.c.bf16 %v1461, %v1461
      %v1471 = vsel %vm572, %v1464, 0
      %v1474 = vsel %vm572, %v1466, 0
      %1476 = vmatprep.subr.bf16.mxu0 0
      %1477 = vmatpush1.bf16.xpose.msra.mxu0 0
      %1478 = vmatprep.subr.bf16.mxu0 0
      %1479 = vmatpush1.bf16.xpose.msra.mxu0 0
      %1480 = vmatprep.subr.bf16.mxu0 0
      %1481 = vmatpush1.bf16.xpose.msra.mxu0 0
      %1482 = vmatprep.subr.bf16.mxu0 0
      %1483 = vmatpush1.bf16.xpose.msra.mxu0 0
      %1484 = vmatprep.subr.bf16.mxu0 0
      %1485 = vmatpush1.bf16.xpose.msra.mxu0 0
      %1486 = vmatprep.subr.bf16.mxu0 0
      %1487 = vmatpush1.bf16.xpose.msra.mxu0 0
      %1488 = vmatprep.subr.bf16.mxu0 0
      %1489 = vmatpush1.bf16.xpose.msra.mxu0 0
      %1490 = vmatprep.subr.bf16.mxu0 0
      %1491 = vmatpush1.bf16.xpose.msra.mxu0 %v1474
      %1492 = vmatprep.subr.bf16.mxu0 0
      %1493 = vmatpush2.bf16.xpose.msra.mxu0 0
      %1494 = vmatprep.subr.bf16.mxu0 0
      %1495 = vmatpush2.bf16.xpose.msra.mxu0 0
      %1496 = vmatprep.subr.bf16.mxu0 0
      %1497 = vmatpush2.bf16.xpose.msra.mxu0 0
      %1498 = vmatprep.subr.bf16.mxu0 0
      %1499 = vmatpush2.bf16.xpose.msra.mxu0 0
      %1500 = vmatprep.subr.bf16.mxu0 0
      %1501 = vmatpush2.bf16.xpose.msra.mxu0 0
      %1502 = vmatprep.subr.bf16.mxu0 0
      %1503 = vmatpush2.bf16.xpose.msra.mxu0 0
      %1504 = vmatprep.subr.bf16.mxu0 0
      %1505 = vmatpush2.bf16.xpose.msra.mxu0 0
      %1506 = vmatprep.subr.bf16.mxu0 0
      %1507 = vmatpush2.bf16.xpose.msra.mxu0 0
      %1508 = vmatprep.mubr.bf16.mxu0 0
      %1509 = vmatmul.mubr.bf16.gmra.mxu0 %v1471
      %v1510 = vpop.f32.mrf.mxu0
      %v1511 = vadd.f32 %v377, %v1510
      %v1512 = vpop.f32.mrf.mxu0
      %v1513 = vpop.f32.mrf.mxu0
      %v1514 = vpop.f32.mrf.mxu0
      %1515 = vdwg.mxu0
      %v1517 = vsel %vm572, %v1465, 0
      %v1520 = vsel %vm572, %v1467, 0
      %1522 = vmatprep.subr.bf16.mxu0 0
      %1523 = vmatpush1.bf16.xpose.msra.mxu0 0
      %1524 = vmatprep.subr.bf16.mxu0 0
      %1525 = vmatpush1.bf16.xpose.msra.mxu0 0
      %1526 = vmatprep.subr.bf16.mxu0 0
      %1527 = vmatpush1.bf16.xpose.msra.mxu0 0
      %1528 = vmatprep.subr.bf16.mxu0 0
      %1529 = vmatpush1.bf16.xpose.msra.mxu0 0
      %1530 = vmatprep.subr.bf16.mxu0 0
      %1531 = vmatpush1.bf16.xpose.msra.mxu0 0
      %1532 = vmatprep.subr.bf16.mxu0 0
      %1533 = vmatpush1.bf16.xpose.msra.mxu0 0
      %1534 = vmatprep.subr.bf16.mxu0 0
      %1535 = vmatpush1.bf16.xpose.msra.mxu0 0
      %1536 = vmatprep.subr.bf16.mxu0 0
      %1537 = vmatpush1.bf16.xpose.msra.mxu0 %v1520
      %1538 = vmatprep.subr.bf16.mxu0 0
      %1539 = vmatpush2.bf16.xpose.msra.mxu0 0
      %1540 = vmatprep.subr.bf16.mxu0 0
      %1541 = vmatpush2.bf16.xpose.msra.mxu0 0
      %1542 = vmatprep.subr.bf16.mxu0 0
      %1543 = vmatpush2.bf16.xpose.msra.mxu0 0
      %1544 = vmatprep.subr.bf16.mxu0 0
      %1545 = vmatpush2.bf16.xpose.msra.mxu0 0
      %1546 = vmatprep.subr.bf16.mxu0 0
      %1547 = vmatpush2.bf16.xpose.msra.mxu0 0
      %1548 = vmatprep.subr.bf16.mxu0 0
      %1549 = vmatpush2.bf16.xpose.msra.mxu0 0
      %1550 = vmatprep.subr.bf16.mxu0 0
      %1551 = vmatpush2.bf16.xpose.msra.mxu0 0
      %1552 = vmatprep.subr.bf16.mxu0 0
      %1553 = vmatpush2.bf16.xpose.msra.mxu0 0
      %1554 = vmatprep.mubr.bf16.mxu0 0
      %1555 = vmatmul.mubr.bf16.gmra.mxu0 %v1517
      %v1556 = vpop.f32.mrf.mxu0
      %v1557 = vadd.f32 %v377, %v1556
      %v1558 = vpop.f32.mrf.mxu0
      %v1559 = vpop.f32.mrf.mxu0
      %v1560 = vpop.f32.mrf.mxu0
      %1561 = vdwg.mxu0
      %v1562 = vsel %vm572, %v1511, -inf
      %1563 = vmax.xlane.f32.xlu0 %v1562
      %v1564 = vpop.xlane.xlu0 %1563
      %v1565 = vsel %vm572, %v1557, -inf
      %1566 = vmax.xlane.f32.xlu0 %v1565
      %v1567 = vpop.xlane.xlu0 %1566
      %v1568 = vsub.f32 %v1511, %v1564
      %v1569 = vsub.f32 %v1557, %v1567
      %v1570 = vmul.f32 %v1568, 1.442695
      %v1571 = vpow.pop %v1570
      %v1572 = vmul.f32 %v1569, 1.442695
      %v1573 = vpow.pop %v1572
      %v1574 = vsel %vm572, %v1571, 0.0
      %1575 = vadd.xlane.f32.xlu0 %v1574
      %v1576 = vpop.xlane.xlu0 %1575
      %v1577 = vsel %vm572, %v1573, 0.0
      %1578 = vadd.xlane.f32.xlu0 %v1577
      %v1579 = vpop.xlane.xlu0 %1578
      %v1580 = vrcp.pop %v1576
      %v1581 = vrcp.pop %v1579
      %v1582 = vmul.f32 %v1571, %v1580
      %v1583 = vmul.f32 %v1573, %v1581
      %v1584 = vpack.c.bf16 %v1582, %v1582
      %v1585 = vpack.c.bf16 %v1583, %v1583
      %v1587 = vsel %vm572, %v1584, 0
      %v1590 = vsel %vm692, %v1468, 0
      %1592 = vmatprep.subr.bf16.mxu0 0
      %1593 = vmatpush1.bf16.msra.mxu0 0
      %1594 = vmatprep.subr.bf16.mxu0 0
      %1595 = vmatpush1.bf16.msra.mxu0 0
      %1596 = vmatprep.subr.bf16.mxu0 0
      %1597 = vmatpush1.bf16.msra.mxu0 0
      %1598 = vmatprep.subr.bf16.mxu0 0
      %1599 = vmatpush1.bf16.msra.mxu0 0
      %1600 = vmatprep.subr.bf16.mxu0 0
      %1601 = vmatpush1.bf16.msra.mxu0 0
      %1602 = vmatprep.subr.bf16.mxu0 0
      %1603 = vmatpush1.bf16.msra.mxu0 0
      %1604 = vmatprep.subr.bf16.mxu0 0
      %1605 = vmatpush1.bf16.msra.mxu0 0
      %1606 = vmatprep.subr.bf16.mxu0 0
      %1607 = vmatpush1.bf16.msra.mxu0 %v1590
      %1608 = vmatprep.subr.bf16.mxu0 0
      %1609 = vmatpush2.bf16.msra.mxu0 0
      %1610 = vmatprep.subr.bf16.mxu0 0
      %1611 = vmatpush2.bf16.msra.mxu0 0
      %1612 = vmatprep.subr.bf16.mxu0 0
      %1613 = vmatpush2.bf16.msra.mxu0 0
      %1614 = vmatprep.subr.bf16.mxu0 0
      %1615 = vmatpush2.bf16.msra.mxu0 0
      %1616 = vmatprep.subr.bf16.mxu0 0
      %1617 = vmatpush2.bf16.msra.mxu0 0
      %1618 = vmatprep.subr.bf16.mxu0 0
      %1619 = vmatpush2.bf16.msra.mxu0 0
      %1620 = vmatprep.subr.bf16.mxu0 0
      %1621 = vmatpush2.bf16.msra.mxu0 0
      %1622 = vmatprep.subr.bf16.mxu0 0
      %1623 = vmatpush2.bf16.msra.mxu0 0
      %1624 = vmatprep.mubr.bf16.mxu0 0
      %1625 = vmatmul.mubr.bf16.gmra.mxu0 %v1587
      %v1626 = vpop.f32.mrf.mxu0
      %v1627 = vadd.f32 0.0, %v1626
      %v1628 = vpop.f32.mrf.mxu0
      %v1629 = vpop.f32.mrf.mxu0
      %v1630 = vpop.f32.mrf.mxu0
      %1631 = vdwg.mxu0
      %v1633 = vsel %vm572, %v1585, 0
      %v1636 = vsel %vm692, %v1469, 0
      %1638 = vmatprep.subr.bf16.mxu0 0
      %1639 = vmatpush1.bf16.msra.mxu0 0
      %1640 = vmatprep.subr.bf16.mxu0 0
      %1641 = vmatpush1.bf16.msra.mxu0 0
      %1642 = vmatprep.subr.bf16.mxu0 0
      %1643 = vmatpush1.bf16.msra.mxu0 0
      %1644 = vmatprep.subr.bf16.mxu0 0
      %1645 = vmatpush1.bf16.msra.mxu0 0
      %1646 = vmatprep.subr.bf16.mxu0 0
      %1647 = vmatpush1.bf16.msra.mxu0 0
      %1648 = vmatprep.subr.bf16.mxu0 0
      %1649 = vmatpush1.bf16.msra.mxu0 0
      %1650 = vmatprep.subr.bf16.mxu0 0
      %1651 = vmatpush1.bf16.msra.mxu0 0
      %1652 = vmatprep.subr.bf16.mxu0 0
      %1653 = vmatpush1.bf16.msra.mxu0 %v1636
      %1654 = vmatprep.subr.bf16.mxu0 0
      %1655 = vmatpush2.bf16.msra.mxu0 0
      %1656 = vmatprep.subr.bf16.mxu0 0
      %1657 = vmatpush2.bf16.msra.mxu0 0
      %1658 = vmatprep.subr.bf16.mxu0 0
      %1659 = vmatpush2.bf16.msra.mxu0 0
      %1660 = vmatprep.subr.bf16.mxu0 0
      %1661 = vmatpush2.bf16.msra.mxu0 0
      %1662 = vmatprep.subr.bf16.mxu0 0
      %1663 = vmatpush2.bf16.msra.mxu0 0
      %1664 = vmatprep.subr.bf16.mxu0 0
      %1665 = vmatpush2.bf16.msra.mxu0 0
      %1666 = vmatprep.subr.bf16.mxu0 0
      %1667 = vmatpush2.bf16.msra.mxu0 0
      %1668 = vmatprep.subr.bf16.mxu0 0
      %1669 = vmatpush2.bf16.msra.mxu0 0
      %1670 = vmatprep.mubr.bf16.mxu0 0
      %1671 = vmatmul.mubr.bf16.gmra.mxu0 %v1633
      %v1672 = vpop.f32.mrf.mxu0
      %v1673 = vadd.f32 0.0, %v1672
      %v1674 = vpop.f32.mrf.mxu0
      %v1675 = vpop.f32.mrf.mxu0
      %v1676 = vpop.f32.mrf.mxu0
      %1677 = vdwg.mxu0
      %v1678 = vpack.c.bf16 %v1673, %v1627
      %s1679 = scalar_lea.vmem %s306, 8
      %v1680 = vld [vmem:[%s1679] sm:$0xf]
      %v1682 = vsel %vm572, %v1678, 0
      %v1685 = vsel %vm692, %v1680, 0
      %1687 = vmatprep.subr.bf16.mxu0 0
      %1688 = vmatpush1.bf16.msra.mxu0 0
      %1689 = vmatprep.subr.bf16.mxu0 0
      %1690 = vmatpush1.bf16.msra.mxu0 0
      %1691 = vmatprep.subr.bf16.mxu0 0
      %1692 = vmatpush1.bf16.msra.mxu0 0
      %1693 = vmatprep.subr.bf16.mxu0 0
      %1694 = vmatpush1.bf16.msra.mxu0 0
      %1695 = vmatprep.subr.bf16.mxu0 0
      %1696 = vmatpush1.bf16.msra.mxu0 0
      %1697 = vmatprep.subr.bf16.mxu0 0
      %1698 = vmatpush1.bf16.msra.mxu0 0
      %1699 = vmatprep.subr.bf16.mxu0 0
      %1700 = vmatpush1.bf16.msra.mxu0 0
      %1701 = vmatprep.subr.bf16.mxu0 0
      %1702 = vmatpush1.bf16.msra.mxu0 %v1685
      %1703 = vmatprep.subr.bf16.mxu0 0
      %1704 = vmatpush2.bf16.msra.mxu0 0
      %1705 = vmatprep.subr.bf16.mxu0 0
      %1706 = vmatpush2.bf16.msra.mxu0 0
      %1707 = vmatprep.subr.bf16.mxu0 0
      %1708 = vmatpush2.bf16.msra.mxu0 0
      %1709 = vmatprep.subr.bf16.mxu0 0
      %1710 = vmatpush2.bf16.msra.mxu0 0
      %1711 = vmatprep.subr.bf16.mxu0 0
      %1712 = vmatpush2.bf16.msra.mxu0 0
      %1713 = vmatprep.subr.bf16.mxu0 0
      %1714 = vmatpush2.bf16.msra.mxu0 0
      %1715 = vmatprep.subr.bf16.mxu0 0
      %1716 = vmatpush2.bf16.msra.mxu0 0
      %1717 = vmatprep.subr.bf16.mxu0 0
      %1718 = vmatpush2.bf16.msra.mxu0 0
      %1719 = vmatprep.mubr.bf16.mxu0 0
      %1720 = vmatmul.mubr.bf16.gmra.mxu0 %v1682
      %v1721 = vpop.f32.mrf.mxu0
      %v1722 = vadd.f32 0.0, %v1721
      %v1723 = vpop.f32.mrf.mxu0
      %v1724 = vpop.f32.mrf.mxu0
      %v1725 = vadd.f32 0.0, %v1724
      %v1726 = vpop.f32.mrf.mxu0
      %1727 = vdwg.mxu0
      %v1728 = vadd.f32 %v1275, %v1722
      %v1729 = vadd.f32 %v1278, %v1725
      %s1730 = scalar_lea.vmem %s301, 48
      %v1731 = vld [vmem:[%s1730] sm:$0xf]
      %v1732 = vld [vmem:[%s1730 + $0x4] sm:$0xf]
      %v1733 = vld [vmem:[%s1730 + $0x8] sm:$0xf]
      %v1734 = vld [vmem:[%s1730 + $0xc] sm:$0xf]
      %v1739 = vunpack.c.l.b16 %v1731
      %v1740 = vunpack.c.l.b16 %v1732
      %v1741 = vunpack.c.l.b16 %v1733
      %v1742 = vunpack.c.l.b16 %v1734
      %v1743 = vpack.c.b16 %v1740, %v1739
      %v1744 = vpack.c.b16 %v1742, %v1741
      %1747 = vrot.lane.b32.xlu0 %v385, 104
      %v1748 = vpop.permute.xlu0 %1747
      %1750 = vmatprep.subr.bf16.mxu0 0
      %1751 = vmatpush1.bf16.msra.mxu0 0
      %1752 = vmatprep.subr.bf16.mxu0 0
      %1753 = vmatpush1.bf16.msra.mxu0 0
      %1754 = vmatprep.subr.bf16.mxu0 0
      %1755 = vmatpush1.bf16.msra.mxu0 0
      %1756 = vmatprep.subr.bf16.mxu0 0
      %1757 = vmatpush1.bf16.msra.mxu0 0
      %1758 = vmatprep.subr.bf16.mxu0 0
      %1759 = vmatpush1.bf16.msra.mxu0 0
      %1760 = vmatprep.subr.bf16.mxu0 0
      %1761 = vmatpush1.bf16.msra.mxu0 0
      %1762 = vmatprep.subr.bf16.mxu0 0
      %1763 = vmatpush1.bf16.msra.mxu0 %v1744
      %1764 = vmatprep.subr.bf16.mxu0 0
      %1765 = vmatpush1.bf16.msra.mxu0 %v1743
      %1766 = vmatprep.subr.bf16.mxu0 0
      %1767 = vmatpush2.bf16.msra.mxu0 0
      %1768 = vmatprep.subr.bf16.mxu0 0
      %1769 = vmatpush2.bf16.msra.mxu0 0
      %1770 = vmatprep.subr.bf16.mxu0 0
      %1771 = vmatpush2.bf16.msra.mxu0 0
      %1772 = vmatprep.subr.bf16.mxu0 0
      %1773 = vmatpush2.bf16.msra.mxu0 0
      %1774 = vmatprep.subr.bf16.mxu0 0
      %1775 = vmatpush2.bf16.msra.mxu0 0
      %1776 = vmatprep.subr.bf16.mxu0 0
      %1777 = vmatpush2.bf16.msra.mxu0 0
      %1778 = vmatprep.subr.bf16.mxu0 0
      %1779 = vmatpush2.bf16.msra.mxu0 0
      %1780 = vmatprep.subr.bf16.mxu0 0
      %1781 = vmatpush2.bf16.msra.mxu0 0
      %1782 = vmatprep.mubr.bf16.mxu0 0
      %1783 = vmatmul.mubr.bf16.gmra.mxu0 %v399
      %v1784 = vpop.f32.mrf.mxu0
      %v1785 = vadd.f32 %v1748, %v1784
      %v1786 = vpop.f32.mrf.mxu0
      %v1787 = vpop.f32.mrf.mxu0
      %v1788 = vadd.f32 %v1748, %v1787
      %v1789 = vpop.f32.mrf.mxu0
      %1790 = vdwg.mxu0
      %s1791 = scalar_lea.vmem %s301, 112
      %v1792 = vld [vmem:[%s1791] sm:$0xf]
      %v1793 = vld [vmem:[%s1791 + $0x4] sm:$0xf]
      %v1794 = vld [vmem:[%s1791 + $0x8] sm:$0xf]
      %v1795 = vld [vmem:[%s1791 + $0xc] sm:$0xf]
      %v1800 = vunpack.c.l.b16 %v1792
      %v1801 = vunpack.c.l.b16 %v1793
      %v1802 = vunpack.c.l.b16 %v1794
      %v1803 = vunpack.c.l.b16 %v1795
      %v1804 = vpack.c.b16 %v1801, %v1800
      %v1805 = vpack.c.b16 %v1803, %v1802
      %1808 = vrot.lane.b32.xlu0 %v450, 104
      %v1809 = vpop.permute.xlu0 %1808
      %1811 = vmatprep.subr.bf16.mxu0 0
      %1812 = vmatpush1.bf16.msra.mxu0 0
      %1813 = vmatprep.subr.bf16.mxu0 0
      %1814 = vmatpush1.bf16.msra.mxu0 0
      %1815 = vmatprep.subr.bf16.mxu0 0
      %1816 = vmatpush1.bf16.msra.mxu0 0
      %1817 = vmatprep.subr.bf16.mxu0 0
      %1818 = vmatpush1.bf16.msra.mxu0 0
      %1819 = vmatprep.subr.bf16.mxu0 0
      %1820 = vmatpush1.bf16.msra.mxu0 0
      %1821 = vmatprep.subr.bf16.mxu0 0
      %1822 = vmatpush1.bf16.msra.mxu0 0
      %1823 = vmatprep.subr.bf16.mxu0 0
      %1824 = vmatpush1.bf16.msra.mxu0 %v1805
      %1825 = vmatprep.subr.bf16.mxu0 0
      %1826 = vmatpush1.bf16.msra.mxu0 %v1804
      %1827 = vmatprep.subr.bf16.mxu0 0
      %1828 = vmatpush2.bf16.msra.mxu0 0
      %1829 = vmatprep.subr.bf16.mxu0 0
      %1830 = vmatpush2.bf16.msra.mxu0 0
      %1831 = vmatprep.subr.bf16.mxu0 0
      %1832 = vmatpush2.bf16.msra.mxu0 0
      %1833 = vmatprep.subr.bf16.mxu0 0
      %1834 = vmatpush2.bf16.msra.mxu0 0
      %1835 = vmatprep.subr.bf16.mxu0 0
      %1836 = vmatpush2.bf16.msra.mxu0 0
      %1837 = vmatprep.subr.bf16.mxu0 0
      %1838 = vmatpush2.bf16.msra.mxu0 0
      %1839 = vmatprep.subr.bf16.mxu0 0
      %1840 = vmatpush2.bf16.msra.mxu0 0
      %1841 = vmatprep.subr.bf16.mxu0 0
      %1842 = vmatpush2.bf16.msra.mxu0 0
      %1843 = vmatprep.mubr.bf16.mxu0 0
      %1844 = vmatmul.mubr.bf16.gmra.mxu0 %v399
      %v1845 = vpop.f32.mrf.mxu0
      %v1846 = vadd.f32 %v1809, %v1845
      %v1847 = vpop.f32.mrf.mxu0
      %v1848 = vpop.f32.mrf.mxu0
      %v1849 = vadd.f32 %v1809, %v1848
      %v1850 = vpop.f32.mrf.mxu0
      %1851 = vdwg.mxu0
      %s1852 = scalar_lea.vmem %s301, 176
      %v1853 = vld [vmem:[%s1852] sm:$0xf]
      %v1854 = vld [vmem:[%s1852 + $0x4] sm:$0xf]
      %v1855 = vld [vmem:[%s1852 + $0x8] sm:$0xf]
      %v1856 = vld [vmem:[%s1852 + $0xc] sm:$0xf]
      %v1861 = vunpack.c.l.b16 %v1853
      %v1862 = vunpack.c.l.b16 %v1854
      %v1863 = vunpack.c.l.b16 %v1855
      %v1864 = vunpack.c.l.b16 %v1856
      %v1865 = vpack.c.b16 %v1862, %v1861
      %v1866 = vpack.c.b16 %v1864, %v1863
      %1869 = vrot.lane.b32.xlu0 %v512, 104
      %v1870 = vpop.permute.xlu0 %1869
      %1872 = vmatprep.subr.bf16.mxu0 0
      %1873 = vmatpush1.bf16.msra.mxu0 0
      %1874 = vmatprep.subr.bf16.mxu0 0
      %1875 = vmatpush1.bf16.msra.mxu0 0
      %1876 = vmatprep.subr.bf16.mxu0 0
      %1877 = vmatpush1.bf16.msra.mxu0 0
      %1878 = vmatprep.subr.bf16.mxu0 0
      %1879 = vmatpush1.bf16.msra.mxu0 0
      %1880 = vmatprep.subr.bf16.mxu0 0
      %1881 = vmatpush1.bf16.msra.mxu0 0
      %1882 = vmatprep.subr.bf16.mxu0 0
      %1883 = vmatpush1.bf16.msra.mxu0 0
      %1884 = vmatprep.subr.bf16.mxu0 0
      %1885 = vmatpush1.bf16.msra.mxu0 %v1866
      %1886 = vmatprep.subr.bf16.mxu0 0
      %1887 = vmatpush1.bf16.msra.mxu0 %v1865
      %1888 = vmatprep.subr.bf16.mxu0 0
      %1889 = vmatpush2.bf16.msra.mxu0 0
      %1890 = vmatprep.subr.bf16.mxu0 0
      %1891 = vmatpush2.bf16.msra.mxu0 0
      %1892 = vmatprep.subr.bf16.mxu0 0
      %1893 = vmatpush2.bf16.msra.mxu0 0
      %1894 = vmatprep.subr.bf16.mxu0 0
      %1895 = vmatpush2.bf16.msra.mxu0 0
      %1896 = vmatprep.subr.bf16.mxu0 0
      %1897 = vmatpush2.bf16.msra.mxu0 0
      %1898 = vmatprep.subr.bf16.mxu0 0
      %1899 = vmatpush2.bf16.msra.mxu0 0
      %1900 = vmatprep.subr.bf16.mxu0 0
      %1901 = vmatpush2.bf16.msra.mxu0 0
      %1902 = vmatprep.subr.bf16.mxu0 0
      %1903 = vmatpush2.bf16.msra.mxu0 0
      %1904 = vmatprep.mubr.bf16.mxu0 0
      %1905 = vmatmul.mubr.bf16.gmra.mxu0 %v399
      %v1906 = vpop.f32.mrf.mxu0
      %v1907 = vadd.f32 %v1870, %v1906
      %v1908 = vpop.f32.mrf.mxu0
      %v1909 = vpop.f32.mrf.mxu0
      %v1910 = vadd.f32 %v1870, %v1909
      %v1911 = vpop.f32.mrf.mxu0
      %1912 = vdwg.mxu0
      %v1913 = vpack.c.bf16 %v1785, %v1785
      %v1914 = vpack.c.bf16 %v1788, %v1788
      %v1915 = vpack.c.bf16 %v1846, %v1846
      %v1916 = vpack.c.bf16 %v1849, %v1849
      %v1917 = vpack.c.bf16 %v1907, %v1907
      %v1918 = vpack.c.bf16 %v1910, %v1910
      %v1920 = vsel %vm572, %v1913, 0
      %v1923 = vsel %vm572, %v1915, 0
      %1925 = vmatprep.subr.bf16.mxu0 0
      %1926 = vmatpush1.bf16.xpose.msra.mxu0 0
      %1927 = vmatprep.subr.bf16.mxu0 0
      %1928 = vmatpush1.bf16.xpose.msra.mxu0 0
      %1929 = vmatprep.subr.bf16.mxu0 0
      %1930 = vmatpush1.bf16.xpose.msra.mxu0 0
      %1931 = vmatprep.subr.bf16.mxu0 0
      %1932 = vmatpush1.bf16.xpose.msra.mxu0 0
      %1933 = vmatprep.subr.bf16.mxu0 0
      %1934 = vmatpush1.bf16.xpose.msra.mxu0 0
      %1935 = vmatprep.subr.bf16.mxu0 0
      %1936 = vmatpush1.bf16.xpose.msra.mxu0 0
      %1937 = vmatprep.subr.bf16.mxu0 0
      %1938 = vmatpush1.bf16.xpose.msra.mxu0 0
      %1939 = vmatprep.subr.bf16.mxu0 0
      %1940 = vmatpush1.bf16.xpose.msra.mxu0 %v1923
      %1941 = vmatprep.subr.bf16.mxu0 0
      %1942 = vmatpush2.bf16.xpose.msra.mxu0 0
      %1943 = vmatprep.subr.bf16.mxu0 0
      %1944 = vmatpush2.bf16.xpose.msra.mxu0 0
      %1945 = vmatprep.subr.bf16.mxu0 0
      %1946 = vmatpush2.bf16.xpose.msra.mxu0 0
      %1947 = vmatprep.subr.bf16.mxu0 0
      %1948 = vmatpush2.bf16.xpose.msra.mxu0 0
      %1949 = vmatprep.subr.bf16.mxu0 0
      %1950 = vmatpush2.bf16.xpose.msra.mxu0 0
      %1951 = vmatprep.subr.bf16.mxu0 0
      %1952 = vmatpush2.bf16.xpose.msra.mxu0 0
      %1953 = vmatprep.subr.bf16.mxu0 0
      %1954 = vmatpush2.bf16.xpose.msra.mxu0 0
      %1955 = vmatprep.subr.bf16.mxu0 0
      %1956 = vmatpush2.bf16.xpose.msra.mxu0 0
      %1957 = vmatprep.mubr.bf16.mxu0 0
      %1958 = vmatmul.mubr.bf16.gmra.mxu0 %v1920
      %v1959 = vpop.f32.mrf.mxu0
      %v1960 = vadd.f32 %v377, %v1959
      %v1961 = vpop.f32.mrf.mxu0
      %v1962 = vpop.f32.mrf.mxu0
      %v1963 = vpop.f32.mrf.mxu0
      %1964 = vdwg.mxu0
      %v1966 = vsel %vm572, %v1914, 0
      %v1969 = vsel %vm572, %v1916, 0
      %1971 = vmatprep.subr.bf16.mxu0 0
      %1972 = vmatpush1.bf16.xpose.msra.mxu0 0
      %1973 = vmatprep.subr.bf16.mxu0 0
      %1974 = vmatpush1.bf16.xpose.msra.mxu0 0
      %1975 = vmatprep.subr.bf16.mxu0 0
      %1976 = vmatpush1.bf16.xpose.msra.mxu0 0
      %1977 = vmatprep.subr.bf16.mxu0 0
      %1978 = vmatpush1.bf16.xpose.msra.mxu0 0
      %1979 = vmatprep.subr.bf16.mxu0 0
      %1980 = vmatpush1.bf16.xpose.msra.mxu0 0
      %1981 = vmatprep.subr.bf16.mxu0 0
      %1982 = vmatpush1.bf16.xpose.msra.mxu0 0
      %1983 = vmatprep.subr.bf16.mxu0 0
      %1984 = vmatpush1.bf16.xpose.msra.mxu0 0
      %1985 = vmatprep.subr.bf16.mxu0 0
      %1986 = vmatpush1.bf16.xpose.msra.mxu0 %v1969
      %1987 = vmatprep.subr.bf16.mxu0 0
      %1988 = vmatpush2.bf16.xpose.msra.mxu0 0
      %1989 = vmatprep.subr.bf16.mxu0 0
      %1990 = vmatpush2.bf16.xpose.msra.mxu0 0
      %1991 = vmatprep.subr.bf16.mxu0 0
      %1992 = vmatpush2.bf16.xpose.msra.mxu0 0
      %1993 = vmatprep.subr.bf16.mxu0 0
      %1994 = vmatpush2.bf16.xpose.msra.mxu0 0
      %1995 = vmatprep.subr.bf16.mxu0 0
      %1996 = vmatpush2.bf16.xpose.msra.mxu0 0
      %1997 = vmatprep.subr.bf16.mxu0 0
      %1998 = vmatpush2.bf16.xpose.msra.mxu0 0
      %1999 = vmatprep.subr.bf16.mxu0 0
      %2000 = vmatpush2.bf16.xpose.msra.mxu0 0
      %2001 = vmatprep.subr.bf16.mxu0 0
      %2002 = vmatpush2.bf16.xpose.msra.mxu0 0
      %2003 = vmatprep.mubr.bf16.mxu0 0
      %2004 = vmatmul.mubr.bf16.gmra.mxu0 %v1966
      %v2005 = vpop.f32.mrf.mxu0
      %v2006 = vadd.f32 %v377, %v2005
      %v2007 = vpop.f32.mrf.mxu0
      %v2008 = vpop.f32.mrf.mxu0
      %v2009 = vpop.f32.mrf.mxu0
      %2010 = vdwg.mxu0
      %v2011 = vsel %vm572, %v1960, -inf
      %2012 = vmax.xlane.f32.xlu0 %v2011
      %v2013 = vpop.xlane.xlu0 %2012
      %v2014 = vsel %vm572, %v2006, -inf
      %2015 = vmax.xlane.f32.xlu0 %v2014
      %v2016 = vpop.xlane.xlu0 %2015
      %v2017 = vsub.f32 %v1960, %v2013
      %v2018 = vsub.f32 %v2006, %v2016
      %v2019 = vmul.f32 %v2017, 1.442695
      %v2020 = vpow.pop %v2019
      %v2021 = vmul.f32 %v2018, 1.442695
      %v2022 = vpow.pop %v2021
      %v2023 = vsel %vm572, %v2020, 0.0
      %2024 = vadd.xlane.f32.xlu0 %v2023
      %v2025 = vpop.xlane.xlu0 %2024
      %v2026 = vsel %vm572, %v2022, 0.0
      %2027 = vadd.xlane.f32.xlu0 %v2026
      %v2028 = vpop.xlane.xlu0 %2027
      %v2029 = vrcp.pop %v2025
      %v2030 = vrcp.pop %v2028
      %v2031 = vmul.f32 %v2020, %v2029
      %v2032 = vmul.f32 %v2022, %v2030
      %v2033 = vpack.c.bf16 %v2031, %v2031
      %v2034 = vpack.c.bf16 %v2032, %v2032
      %v2036 = vsel %vm572, %v2033, 0
      %v2039 = vsel %vm692, %v1917, 0
      %2041 = vmatprep.subr.bf16.mxu0 0
      %2042 = vmatpush1.bf16.msra.mxu0 0
      %2043 = vmatprep.subr.bf16.mxu0 0
      %2044 = vmatpush1.bf16.msra.mxu0 0
      %2045 = vmatprep.subr.bf16.mxu0 0
      %2046 = vmatpush1.bf16.msra.mxu0 0
      %2047 = vmatprep.subr.bf16.mxu0 0
      %2048 = vmatpush1.bf16.msra.mxu0 0
      %2049 = vmatprep.subr.bf16.mxu0 0
      %2050 = vmatpush1.bf16.msra.mxu0 0
      %2051 = vmatprep.subr.bf16.mxu0 0
      %2052 = vmatpush1.bf16.msra.mxu0 0
      %2053 = vmatprep.subr.bf16.mxu0 0
      %2054 = vmatpush1.bf16.msra.mxu0 0
      %2055 = vmatprep.subr.bf16.mxu0 0
      %2056 = vmatpush1.bf16.msra.mxu0 %v2039
      %2057 = vmatprep.subr.bf16.mxu0 0
      %2058 = vmatpush2.bf16.msra.mxu0 0
      %2059 = vmatprep.subr.bf16.mxu0 0
      %2060 = vmatpush2.bf16.msra.mxu0 0
      %2061 = vmatprep.subr.bf16.mxu0 0
      %2062 = vmatpush2.bf16.msra.mxu0 0
      %2063 = vmatprep.subr.bf16.mxu0 0
      %2064 = vmatpush2.bf16.msra.mxu0 0
      %2065 = vmatprep.subr.bf16.mxu0 0
      %2066 = vmatpush2.bf16.msra.mxu0 0
      %2067 = vmatprep.subr.bf16.mxu0 0
      %2068 = vmatpush2.bf16.msra.mxu0 0
      %2069 = vmatprep.subr.bf16.mxu0 0
      %2070 = vmatpush2.bf16.msra.mxu0 0
      %2071 = vmatprep.subr.bf16.mxu0 0
      %2072 = vmatpush2.bf16.msra.mxu0 0
      %2073 = vmatprep.mubr.bf16.mxu0 0
      %2074 = vmatmul.mubr.bf16.gmra.mxu0 %v2036
      %v2075 = vpop.f32.mrf.mxu0
      %v2076 = vadd.f32 0.0, %v2075
      %v2077 = vpop.f32.mrf.mxu0
      %v2078 = vpop.f32.mrf.mxu0
      %v2079 = vpop.f32.mrf.mxu0
      %2080 = vdwg.mxu0
      %v2082 = vsel %vm572, %v2034, 0
      %v2085 = vsel %vm692, %v1918, 0
      %2087 = vmatprep.subr.bf16.mxu0 0
      %2088 = vmatpush1.bf16.msra.mxu0 0
      %2089 = vmatprep.subr.bf16.mxu0 0
      %2090 = vmatpush1.bf16.msra.mxu0 0
      %2091 = vmatprep.subr.bf16.mxu0 0
      %2092 = vmatpush1.bf16.msra.mxu0 0
      %2093 = vmatprep.subr.bf16.mxu0 0
      %2094 = vmatpush1.bf16.msra.mxu0 0
      %2095 = vmatprep.subr.bf16.mxu0 0
      %2096 = vmatpush1.bf16.msra.mxu0 0
      %2097 = vmatprep.subr.bf16.mxu0 0
      %2098 = vmatpush1.bf16.msra.mxu0 0
      %2099 = vmatprep.subr.bf16.mxu0 0
      %2100 = vmatpush1.bf16.msra.mxu0 0
      %2101 = vmatprep.subr.bf16.mxu0 0
      %2102 = vmatpush1.bf16.msra.mxu0 %v2085
      %2103 = vmatprep.subr.bf16.mxu0 0
      %2104 = vmatpush2.bf16.msra.mxu0 0
      %2105 = vmatprep.subr.bf16.mxu0 0
      %2106 = vmatpush2.bf16.msra.mxu0 0
      %2107 = vmatprep.subr.bf16.mxu0 0
      %2108 = vmatpush2.bf16.msra.mxu0 0
      %2109 = vmatprep.subr.bf16.mxu0 0
      %2110 = vmatpush2.bf16.msra.mxu0 0
      %2111 = vmatprep.subr.bf16.mxu0 0
      %2112 = vmatpush2.bf16.msra.mxu0 0
      %2113 = vmatprep.subr.bf16.mxu0 0
      %2114 = vmatpush2.bf16.msra.mxu0 0
      %2115 = vmatprep.subr.bf16.mxu0 0
      %2116 = vmatpush2.bf16.msra.mxu0 0
      %2117 = vmatprep.subr.bf16.mxu0 0
      %2118 = vmatpush2.bf16.msra.mxu0 0
      %2119 = vmatprep.mubr.bf16.mxu0 0
      %2120 = vmatmul.mubr.bf16.gmra.mxu0 %v2082
      %v2121 = vpop.f32.mrf.mxu0
      %v2122 = vadd.f32 0.0, %v2121
      %v2123 = vpop.f32.mrf.mxu0
      %v2124 = vpop.f32.mrf.mxu0
      %v2125 = vpop.f32.mrf.mxu0
      %2126 = vdwg.mxu0
      %v2127 = vpack.c.bf16 %v2122, %v2076
      %s2128 = scalar_lea.vmem %s306, 12
      %v2129 = vld [vmem:[%s2128] sm:$0xf]
      %v2131 = vsel %vm572, %v2127, 0
      %v2134 = vsel %vm692, %v2129, 0
      %2136 = vmatprep.subr.bf16.mxu0 0
      %2137 = vmatpush1.bf16.msra.mxu0 0
      %2138 = vmatprep.subr.bf16.mxu0 0
      %2139 = vmatpush1.bf16.msra.mxu0 0
      %2140 = vmatprep.subr.bf16.mxu0 0
      %2141 = vmatpush1.bf16.msra.mxu0 0
      %2142 = vmatprep.subr.bf16.mxu0 0
      %2143 = vmatpush1.bf16.msra.mxu0 0
      %2144 = vmatprep.subr.bf16.mxu0 0
      %2145 = vmatpush1.bf16.msra.mxu0 0
      %2146 = vmatprep.subr.bf16.mxu0 0
      %2147 = vmatpush1.bf16.msra.mxu0 0
      %2148 = vmatprep.subr.bf16.mxu0 0
      %2149 = vmatpush1.bf16.msra.mxu0 0
      %2150 = vmatprep.subr.bf16.mxu0 0
      %2151 = vmatpush1.bf16.msra.mxu0 %v2134
      %2152 = vmatprep.subr.bf16.mxu0 0
      %2153 = vmatpush2.bf16.msra.mxu0 0
      %2154 = vmatprep.subr.bf16.mxu0 0
      %2155 = vmatpush2.bf16.msra.mxu0 0
      %2156 = vmatprep.subr.bf16.mxu0 0
      %2157 = vmatpush2.bf16.msra.mxu0 0
      %2158 = vmatprep.subr.bf16.mxu0 0
      %2159 = vmatpush2.bf16.msra.mxu0 0
      %2160 = vmatprep.subr.bf16.mxu0 0
      %2161 = vmatpush2.bf16.msra.mxu0 0
      %2162 = vmatprep.subr.bf16.mxu0 0
      %2163 = vmatpush2.bf16.msra.mxu0 0
      %2164 = vmatprep.subr.bf16.mxu0 0
      %2165 = vmatpush2.bf16.msra.mxu0 0
      %2166 = vmatprep.subr.bf16.mxu0 0
      %2167 = vmatpush2.bf16.msra.mxu0 0
      %2168 = vmatprep.mubr.bf16.mxu0 0
      %2169 = vmatmul.mubr.bf16.gmra.mxu0 %v2131
      %v2170 = vpop.f32.mrf.mxu0
      %v2171 = vadd.f32 0.0, %v2170
      %v2172 = vpop.f32.mrf.mxu0
      %v2173 = vpop.f32.mrf.mxu0
      %v2174 = vadd.f32 0.0, %v2173
      %v2175 = vpop.f32.mrf.mxu0
      %2176 = vdwg.mxu0
      %v2177 = vadd.f32 %v1728, %v2171
      %v2178 = vadd.f32 %v1729, %v2174
      %v2179 = vadd.f32 %v329, %v2177
      %v2180 = vadd.f32 %v330, %v2178
      %v2181 = vlaneseq
      %v2182 = vshrl.u32 %v2181, 7
      %v2183 = vsub.s32 5, %v2182
      %v2184 = vrot.slane %v327, %v2183
      %v2185 = vadd.f32 %v2179, %v2184
      %v2186 = vadd.f32 %v2180, %v2184
      %v2187 = vsel %vm331, %v2185, 0.0
      %2188 = vadd.xlane.f32.xlu0 %v2187
      %v2189 = vpop.xlane.xlu0 %2188
      %v2190 = vsel %vm331, %v2186, 0.0
      %2191 = vadd.xlane.f32.xlu0 %v2190
      %v2192 = vpop.xlane.xlu0 %2191
      %v2193 = vmul.f32 %v2189, %v338
      %v2194 = vmul.f32 %v2192, %v338
      %v2195 = vsub.f32 %v2185, %v2193
      %v2196 = vsub.f32 %v2186, %v2194
      %v2197 = vmul.f32 %v2195, %v2195
      %v2198 = vmul.f32 %v2196, %v2196
      %v2199 = vsel %vm331, %v2197, 0.0
      %2200 = vadd.xlane.f32.xlu0 %v2199
      %v2201 = vpop.xlane.xlu0 %2200
      %v2202 = vsel %vm331, %v2198, 0.0
      %2203 = vadd.xlane.f32.xlu0 %v2202
      %v2204 = vpop.xlane.xlu0 %2203
      %v2205 = vmul.f32 %v2201, %v338
      %v2206 = vmul.f32 %v2204, %v338
      %v2207 = vadd.f32 %v2205, 1e-05
      %v2208 = vadd.f32 %v2206, 1e-05
      %v2209 = vrsqrt.pop %v2207
      %v2210 = vrsqrt.pop %v2208
      %v2211 = vmul.f32 %v2195, %v2209
      %v2212 = vmul.f32 %v2196, %v2210
      %v2213 = vlaneseq
      %v2214 = vshrl.u32 %v2213, 7
      %v2215 = vsub.s32 6, %v2214
      %v2216 = vrot.slane %v327, %v2215
      %v2217 = vmul.f32 %v2211, %v2216
      %v2218 = vmul.f32 %v2212, %v2216
      %v2219 = vlaneseq
      %v2220 = vshrl.u32 %v2219, 7
      %v2221 = vsub.s32 7, %v2220
      %v2222 = vrot.slane %v327, %v2221
      %v2223 = vadd.f32 %v2217, %v2222
      %v2224 = vadd.f32 %v2218, %v2222
      %v2225 = vpack.c.bf16 %v2224, %v2223
      %v2226 = vld [vmem:[%s311] sm:$0xf]
      %v2227 = vld [vmem:[%s311 + $0x4] sm:$0xf]
      %v2228 = vld [vmem:[%s311 + $0x8] sm:$0xf]
      %v2229 = vld [vmem:[%s311 + $0xc] sm:$0xf]
      %v2230 = vlaneseq
      %v2231 = vshrl.u32 %v2230, 7
      %v2232 = vsub.s32 0, %v2231
      %v2233 = vrot.slane %v328, %v2232
      %v2238 = vunpack.c.l.b16 %v2226
      %v2239 = vunpack.c.l.b16 %v2227
      %v2240 = vunpack.c.l.b16 %v2228
      %v2241 = vunpack.c.l.b16 %v2229
      %v2242 = vpack.c.b16 %v2239, %v2238
      %v2243 = vpack.c.b16 %v2241, %v2240
      %v2247 = vsel %vm331, %v2225, 0
      %2249 = vmatprep.subr.bf16.mxu0 0
      %2250 = vmatpush1.bf16.msra.mxu0 0
      %2251 = vmatprep.subr.bf16.mxu0 0
      %2252 = vmatpush1.bf16.msra.mxu0 0
      %2253 = vmatprep.subr.bf16.mxu0 0
      %2254 = vmatpush1.bf16.msra.mxu0 0
      %2255 = vmatprep.subr.bf16.mxu0 0
      %2256 = vmatpush1.bf16.msra.mxu0 0
      %2257 = vmatprep.subr.bf16.mxu0 0
      %2258 = vmatpush1.bf16.msra.mxu0 0
      %2259 = vmatprep.subr.bf16.mxu0 0
      %2260 = vmatpush1.bf16.msra.mxu0 0
      %2261 = vmatprep.subr.bf16.mxu0 0
      %2262 = vmatpush1.bf16.msra.mxu0 %v2243
      %2263 = vmatprep.subr.bf16.mxu0 0
      %2264 = vmatpush1.bf16.msra.mxu0 %v2242
      %2265 = vmatprep.subr.bf16.mxu0 0
      %2266 = vmatpush2.bf16.msra.mxu0 0
      %2267 = vmatprep.subr.bf16.mxu0 0
      %2268 = vmatpush2.bf16.msra.mxu0 0
      %2269 = vmatprep.subr.bf16.mxu0 0
      %2270 = vmatpush2.bf16.msra.mxu0 0
      %2271 = vmatprep.subr.bf16.mxu0 0
      %2272 = vmatpush2.bf16.msra.mxu0 0
      %2273 = vmatprep.subr.bf16.mxu0 0
      %2274 = vmatpush2.bf16.msra.mxu0 0
      %2275 = vmatprep.subr.bf16.mxu0 0
      %2276 = vmatpush2.bf16.msra.mxu0 0
      %2277 = vmatprep.subr.bf16.mxu0 0
      %2278 = vmatpush2.bf16.msra.mxu0 0
      %2279 = vmatprep.subr.bf16.mxu0 0
      %2280 = vmatpush2.bf16.msra.mxu0 0
      %2281 = vmatprep.mubr.bf16.mxu0 0
      %2282 = vmatmul.mubr.bf16.gmra.mxu0 %v2247
      %v2283 = vpop.f32.mrf.mxu0
      %v2284 = vadd.f32 %v2233, %v2283
      %v2285 = vpop.f32.mrf.mxu0
      %v2286 = vpop.f32.mrf.mxu0
      %v2287 = vadd.f32 %v2233, %v2286
      %v2288 = vpop.f32.mrf.mxu0
      %2289 = vdwg.mxu0
      %v2290 = vmul.f32 %v2284, 0.5
      %v2291 = vmul.f32 %v2287, 0.5
      %v2292 = vmul.f32 %v2284, 0.044715
      %v2293 = vmul.f32 %v2287, 0.044715
      %v2294 = vmul.f32 %v2292, %v2284
      %v2295 = vmul.f32 %v2293, %v2287
      %v2296 = vmul.f32 %v2294, %v2284
      %v2297 = vmul.f32 %v2295, %v2287
      %v2298 = vadd.f32 %v2284, %v2296
      %v2299 = vadd.f32 %v2287, %v2297
      %v2300 = vmul.f32 %v2298, 0.7978846
      %v2301 = vmul.f32 %v2299, 0.7978846
      %v2302 = vtanh.pop %v2300
      %v2303 = vtanh.pop %v2301
      %v2304 = vadd.f32 %v2302, 1.0
      %v2305 = vadd.f32 %v2303, 1.0
      %v2306 = vmul.f32 %v2290, %v2304
      %v2307 = vmul.f32 %v2291, %v2305
      %v2308 = vpack.c.bf16 %v2307, %v2306
      %v2309 = vld [vmem:[%s316] sm:$0xf]
      %v2310 = vld [vmem:[%s316 + $0x4] sm:$0xf]
      %v2311 = vld [vmem:[%s316 + $0x8] sm:$0xf]
      %v2312 = vld [vmem:[%s316 + $0xc] sm:$0xf]
      %v2313 = vld [vmem:[%s316 + $0x10] sm:$0xf]
      %v2314 = vld [vmem:[%s316 + $0x14] sm:$0xf]
      %v2315 = vld [vmem:[%s316 + $0x18] sm:$0xf]
      %v2316 = vld [vmem:[%s316 + $0x1c] sm:$0xf]
      %v2317 = vld [vmem:[%s316 + $0x20] sm:$0xf]
      %v2318 = vld [vmem:[%s316 + $0x24] sm:$0xf]
      %v2319 = vld [vmem:[%s316 + $0x28] sm:$0xf]
      %v2320 = vld [vmem:[%s316 + $0x2c] sm:$0xf]
      %v2321 = vld [vmem:[%s316 + $0x30] sm:$0xf]
      %v2322 = vld [vmem:[%s316 + $0x34] sm:$0xf]
      %v2323 = vld [vmem:[%s316 + $0x38] sm:$0xf]
      %v2324 = vld [vmem:[%s316 + $0x3c] sm:$0xf]
      %v2325 = vlaneseq
      %v2326 = vshrl.u32 %v2325, 7
      %v2327 = vsub.s32 1, %v2326
      %v2328 = vrot.slane %v328, %v2327
      %v2345 = vunpack.c.l.b16 %v2309
      %v2346 = vunpack.c.l.b16 %v2310
      %v2347 = vunpack.c.l.b16 %v2311
      %v2348 = vunpack.c.l.b16 %v2312
      %v2349 = vunpack.c.l.b16 %v2313
      %v2350 = vunpack.c.l.b16 %v2314
      %v2351 = vunpack.c.l.b16 %v2315
      %v2352 = vunpack.c.l.b16 %v2316
      %v2353 = vunpack.c.l.b16 %v2317
      %v2354 = vunpack.c.l.b16 %v2318
      %v2355 = vunpack.c.l.b16 %v2319
      %v2356 = vunpack.c.l.b16 %v2320
      %v2357 = vunpack.c.l.b16 %v2321
      %v2358 = vunpack.c.l.b16 %v2322
      %v2359 = vunpack.c.l.b16 %v2323
      %v2360 = vunpack.c.l.b16 %v2324
      %v2361 = vpack.c.b16 %v2346, %v2345
      %v2362 = vpack.c.b16 %v2348, %v2347
      %v2363 = vpack.c.b16 %v2350, %v2349
      %v2364 = vpack.c.b16 %v2352, %v2351
      %v2365 = vpack.c.b16 %v2354, %v2353
      %v2366 = vpack.c.b16 %v2356, %v2355
      %v2367 = vpack.c.b16 %v2358, %v2357
      %v2368 = vpack.c.b16 %v2360, %v2359
      %2377 = vmatprep.subr.bf16.mxu0 0
      %2378 = vmatpush1.bf16.msra.mxu0 %v2368
      %2379 = vmatprep.subr.bf16.mxu0 0
      %2380 = vmatpush1.bf16.msra.mxu0 %v2367
      %2381 = vmatprep.subr.bf16.mxu0 0
      %2382 = vmatpush1.bf16.msra.mxu0 %v2366
      %2383 = vmatprep.subr.bf16.mxu0 0
      %2384 = vmatpush1.bf16.msra.mxu0 %v2365
      %2385 = vmatprep.subr.bf16.mxu0 0
      %2386 = vmatpush1.bf16.msra.mxu0 %v2364
      %2387 = vmatprep.subr.bf16.mxu0 0
      %2388 = vmatpush1.bf16.msra.mxu0 %v2363
      %2389 = vmatprep.subr.bf16.mxu0 0
      %2390 = vmatpush1.bf16.msra.mxu0 %v2362
      %2391 = vmatprep.subr.bf16.mxu0 0
      %2392 = vmatpush1.bf16.msra.mxu0 %v2361
      %2393 = vmatprep.subr.bf16.mxu0 0
      %2394 = vmatpush2.bf16.msra.mxu0 0
      %2395 = vmatprep.subr.bf16.mxu0 0
      %2396 = vmatpush2.bf16.msra.mxu0 0
      %2397 = vmatprep.subr.bf16.mxu0 0
      %2398 = vmatpush2.bf16.msra.mxu0 0
      %2399 = vmatprep.subr.bf16.mxu0 0
      %2400 = vmatpush2.bf16.msra.mxu0 0
      %2401 = vmatprep.subr.bf16.mxu0 0
      %2402 = vmatpush2.bf16.msra.mxu0 0
      %2403 = vmatprep.subr.bf16.mxu0 0
      %2404 = vmatpush2.bf16.msra.mxu0 0
      %2405 = vmatprep.subr.bf16.mxu0 0
      %2406 = vmatpush2.bf16.msra.mxu0 0
      %2407 = vmatprep.subr.bf16.mxu0 0
      %2408 = vmatpush2.bf16.msra.mxu0 0
      %2409 = vmatprep.mubr.bf16.mxu0 0
      %2410 = vmatmul.mubr.bf16.gmra.mxu0 %v2308
      %v2411 = vpop.f32.mrf.mxu0
      %v2412 = vadd.f32 %v2328, %v2411
      %v2413 = vpop.f32.mrf.mxu0
      %v2414 = vpop.f32.mrf.mxu0
      %v2415 = vadd.f32 %v2328, %v2414
      %v2416 = vpop.f32.mrf.mxu0
      %2417 = vdwg.mxu0
      %v2418 = vadd.f32 %v2185, %v2412
      %v2419 = vadd.f32 %v2186, %v2415
      %2420 = vst.msk [vmem:[%s6] sm:$0xff] %vm331, %v2418
      %2421 = vst.msk [vmem:[%s6 + $0x8] sm:$0xff] %vm331, %v2419
      // Predicated region
      $region49: #{gpt_layers_forward.1} parent=43 // pred_check
        %p2422 = pneg %p181
      $region50: #{gpt_layers_forward.1} parent=43 // pred_check_branch
        %2424 = sbr.rel (%p2422) target = $region52
      $region51: #{gpt_layers_forward.1} parent=43 // pred_region
        _
      $region52: #{gpt_layers_forward.1} parent=43 // pred_fallthru
        _
      // Predicated region
      $region53: #{gpt_layers_forward.1} parent=43 // pred_check
        %p2425 = pneg %p181
      $region54: #{gpt_layers_forward.1} parent=43 // pred_check_branch
        %2427 = sbr.rel (%p2425) target = $region56
      $region55: #{gpt_layers_forward.1} parent=43 // pred_region
        _
      $region56: #{gpt_layers_forward.1} parent=43 // pred_fallthru
        _
    $region44: #{gpt_layers_forward.1} parent=5 // pred_fallthru
      _
    %p2428 = scmp.le.s32.totalorder 2, %s12
    // Predicated region
    $region57: #{gpt_layers_forward.1} parent=5 // pred_check
      %p2429 = pneg %p2428
    $region58: #{gpt_layers_forward.1} parent=5 // pred_check_branch
      %2431 = sbr.rel (%p2429) target = $region60
    $region59: #{gpt_layers_forward.1} parent=5 // pred_region
      %s2432 = ssub.s32 %s12, 2
    $region60: #{gpt_layers_forward.1} parent=5 // pred_fallthru
      _
  $region6: #{gpt_layers_forward.1} parent=0 // loop_footer
    %s16 = sadd.s32 1, %s12
  $region7: #{gpt_layers_forward.1} parent=0 // loop_footer_branch
    %11 = sbr.rel target = $region3
  $region8: #{gpt_layers_forward.1} parent=0 // loop_exit
    _

</llo_original>
